<compile_context>
chip_gen: v7x
topology: tpu7x:2x2x1
jax: 0.10.0
libtpu: 0.0.40
codegen_flags: <defaults>
</compile_context>

<pallas_src>
import functools

import jax
import jax.numpy as jnp
from jax import lax
from jax.experimental import pallas as pl
from jax.experimental.pallas import tpu as pltpu


def _make_kernel(split_k: bool):
    """Fused conv3x3 + bias + PReLU + PixelShuffle kernel body."""

    def kernel(x_ref, w_ref, b_ref, a_ref, o_ref, *scratch):
        # x_ref: (1, 1, TH+2, W+2, Cin)  bf16 padded input row tile (2-row halo)
        # w_ref: (9*Cin, r*r*C)          bf16 im2col weights, cols ordered (i,j,c)
        # b_ref: (1, r*r*C)              f32 bias, (i, j, c) order
        # a_ref: (1, r*r*C)              f32 PReLU slopes (= alpha[c])
        # o_ref: (1, TH, r, W, r*C)      bf16 shuffled output: [0,h,i,w,j*C+c]
        #                                is output pixel (h*r+i, w*r+j, c)
        _, TH, r, W, rC = o_ref.shape
        Cin = x_ref.shape[-1]

        x = x_ref[0, 0]                                    # (TH+2, W+2, Cin)

        def row_patch(dy):
            # 3 shifted taps of one kernel row, lane-concatenated: (TH*W, 3*Cin)
            taps = [x[dy:dy + TH, dx:dx + W, :].reshape(TH * W, Cin)
                    for dx in range(3)]
            return jnp.concatenate(taps, axis=-1)

        if split_k:
            # v6e / v7x (256-wide MXU): 3 accumulating K=3*Cin matmuls into an
            # f32 VMEM scratch -> same MXU pass count, 3x smaller live patch.
            acc_ref = scratch[0]
            acc_ref[...] = jnp.dot(row_patch(0), w_ref[0:3 * Cin, :],
                                   preferred_element_type=jnp.float32)
            acc_ref[...] += jnp.dot(row_patch(1), w_ref[3 * Cin:6 * Cin, :],
                                    preferred_element_type=jnp.float32)
            acc = acc_ref[...] + jnp.dot(row_patch(2), w_ref[6 * Cin:9 * Cin, :],
                                         preferred_element_type=jnp.float32)
        else:
            # v5e & older (128-wide MXU): single fused K=9*Cin matmul.
            patch = jnp.concatenate([row_patch(dy) for dy in range(3)], axis=-1)
            acc = jnp.dot(patch, w_ref[...], preferred_element_type=jnp.float32)

        acc = acc + b_ref[...]                             # bias (f32)
        y = jnp.where(acc >= 0, acc, acc * a_ref[...])     # PReLU (f32)
        y = y.astype(o_ref.dtype)                          # (TH*W, r*r*C) bf16

        # PixelShuffle fused into the store: phase-i column block -> output
        # sub-row i.  Static lane slices + leading-dim reshape only.
        for i in range(r):
            o_ref[0, :, i, :, :] = y[:, i * rC:(i + 1) * rC].reshape(TH, W, rC)

    return kernel


def _chip_kind():
    try:
        return jax.devices()[0].device_kind.lower()
    except Exception:
        return ""


def _pick_tile_rows(H, W, C, r, split_k, in_bytes, out_bytes, budget_bytes):
    """Largest row-tile TH whose per-step VMEM estimate fits the budget."""
    rrC = r * r * C

    def est(th):
        inp = 2 * (th + 2) * (W + 2) * C * in_bytes        # 2x-buffered input
        out = 2 * th * W * rrC * out_bytes                 # 2x-buffered output
        acc = th * W * rrC * 4                             # f32 accumulator
        patch = th * W * (3 if split_k else 9) * C * in_bytes
        temp = th * W * rrC * 4                            # f32 partials/PReLU
        return inp + out + acc + patch + temp

    for th in (64, 48, 32, 24, 16, 8):
        if th <= H and est(th) <= budget_bytes:
            return th
    return max(1, min(H, 8))


@functools.partial(jax.jit, static_argnums=4)
def upsample_block(x_nchw, weight_oihw, bias, alpha, scale_factor):
    """Matches nn.Sequential-style: PReLU(PixelShuffle(Conv2d(x)))."""
    N, C, H, W = x_nchw.shape
    r = scale_factor
    Cout = C * r * r
    assert weight_oihw.shape == (Cout, C, 3, 3)

    compute_dtype = jnp.bfloat16

    kind = _chip_kind()
    # 128-wide MXU (<= v5): keep the fused K; 256-wide (v6e/v7x): per-ky split.
    split_k = not any(t in kind for t in ("v2", "v3", "v4", "v5"))
    # Physical VMEM per core: 64 MiB on v7x, ~16 MiB on v2/v3, 128 MiB otherwise.
    if "v7" in kind:
        phys_mib = 64
    elif "v2" in kind or "v3" in kind:
        phys_mib = 16
    else:
        phys_mib = 128
    vmem_limit = (phys_mib * 3 // 4) << 20          # explicit scoped-VMEM limit
    budget = (phys_mib * 9 // 20) << 20             # ~45% of physical for tiles

    TH = _pick_tile_rows(H, W, C, r, split_k, 2, 2, budget)
    T = pl.cdiv(H, TH)
    Hp = T * TH                                      # padded row count

    # NCHW -> NHWC, pad=1 spatially (+ zero tail rows so T*TH covers H), then
    # pre-tile rows with a 2-row halo and cast to bf16 for the MXU.
    x = jnp.transpose(x_nchw, (0, 2, 3, 1))                        # (N,H,W,C)
    x_pad = jnp.pad(x, ((0, 0), (1, 1 + Hp - H), (1, 1), (0, 0)))  # (N,Hp+2,W+2,C)
    row_idx = (jnp.arange(T) * TH)[:, None] + jnp.arange(TH + 2)[None, :]
    x_tiles = x_pad[:, row_idx].astype(compute_dtype)   # (N, T, TH+2, W+2, C)

    # Re-order params so matmul columns are (i, j, c): i,j = sub-pixel phases,
    # c = channel after PixelShuffle.  PyTorch conv channel o = c*r*r + i*r + j.
    w = weight_oihw.reshape(C, r, r, C, 3, 3)            # (c, i, j, cin, ky, kx)
    w = jnp.transpose(w, (4, 5, 3, 1, 2, 0))             # (ky, kx, cin, i, j, c)
    w_mat = w.reshape(9 * C, r * r * C).astype(compute_dtype)
    b_mat = jnp.transpose(bias.reshape(C, r, r), (1, 2, 0)).reshape(1, r * r * C)
    b_mat = b_mat.astype(jnp.float32)
    a_mat = jnp.tile(alpha, r * r).reshape(1, r * r * C).astype(jnp.float32)

    rC = r * C
    scratch = ([pltpu.VMEM((TH * W, r * r * C), jnp.float32)] if split_k else [])

    out = pl.pallas_call(
        _make_kernel(split_k),
        out_shape=jax.ShapeDtypeStruct((N, Hp, r, W, rC), compute_dtype),
        grid_spec=pltpu.PrefetchScalarGridSpec(
            num_scalar_prefetch=0,
            grid=(N, T),
            in_specs=[
                pl.BlockSpec((1, 1, TH + 2, W + 2, C),
                             lambda n, t: (n, t, 0, 0, 0)),
                pl.BlockSpec((9 * C, r * r * C), lambda n, t: (0, 0)),
                pl.BlockSpec((1, r * r * C), lambda n, t: (0, 0)),
                pl.BlockSpec((1, r * r * C), lambda n, t: (0, 0)),
            ],
            out_specs=pl.BlockSpec((1, TH, r, W, rC),
                                   lambda n, t: (n, t, 0, 0, 0)),
            scratch_shapes=scratch,
        ),
        compiler_params=pltpu.CompilerParams(
            dimension_semantics=("parallel", "parallel"),
            vmem_limit_bytes=vmem_limit),
    )(x_tiles, w_mat, b_mat, a_mat)

    # (N, Hp, r, W, r*C) is exactly the shuffled NHWC output (plus padded tail
    # rows) -> slice, free reshape, cast back, NCHW boundary transpose.
    out = out[:, :H].reshape(N, H * r, W * r, C).astype(x_nchw.dtype)
    return jnp.transpose(out, (0, 3, 1, 2))


def reference(x_nchw, weight_oihw, bias, alpha, r):
    """Pure-JAX reference mirroring the PyTorch module exactly (f32)."""
    y = lax.conv_general_dilated(
        x_nchw, weight_oihw, window_strides=(1, 1),
        padding=((1, 1), (1, 1)),
        dimension_numbers=("NCHW", "OIHW", "NCHW"))
    y = y + bias.reshape(1, -1, 1, 1)
    N, Co, H, W = y.shape
    C = Co // (r * r)
    y = y.reshape(N, C, r, r, H, W)
    y = jnp.transpose(y, (0, 1, 4, 2, 5, 3)).reshape(N, C, H * r, W * r)
    a = alpha.reshape(1, C, 1, 1)
    return jnp.where(y >= 0, y, y * a)


if __name__ == "__main__":
    N, C, H, W, r = 2, 4, 16, 16, 2  # in_c=4, scale_factor=2

    key = jax.random.PRNGKey(0)
    k1, k2, k3 = jax.random.split(key, 3)
    x = jax.random.normal(k1, (N, C, H, W), dtype=jnp.float32)
    weight = jax.random.normal(k2, (C * r * r, C, 3, 3), dtype=jnp.float32) * 0.1
    bias = jax.random.normal(k3, (C * r * r,), dtype=jnp.float32) * 0.1
    alpha = jnp.full((C,), 0.25, dtype=jnp.float32)  # PyTorch PReLU default

    out = upsample_block(x, weight, bias, alpha, r)
    out = jax.block_until_ready(out)

    ref = reference(x, weight, bias, alpha, r)
    assert out.shape == (N, C, H * r, W * r), out.shape
    # bf16 MXU operands + bf16 writeback (f32 accumulation) -> loose tolerance.
    assert jnp.allclose(out, ref, atol=5e-2, rtol=5e-2), \
        float(jnp.max(jnp.abs(out - ref)))
    print("KERNEL_OK")
</pallas_src>

<mosaic_0001>
module attributes {stable_mosaic.version = 11 : i64} {
  func.func @kernel(%arg0: i32, %arg1: i32, %arg2: memref<1x1x18x18x4xbf16, #tpu.memory_space<vmem>>, %arg3: memref<36x16xbf16, #tpu.memory_space<vmem>>, %arg4: memref<1x16xf32, #tpu.memory_space<vmem>>, %arg5: memref<1x16xf32, #tpu.memory_space<vmem>>, %arg6: memref<1x16x2x16x8xbf16, #tpu.memory_space<vmem>>, %arg7: memref<256x16xf32, #tpu.memory_space<vmem>>) attributes {dimension_semantics = [#tpu.dimension_semantics<parallel>, #tpu.dimension_semantics<parallel>], iteration_bounds = array<i64: 2, 1>, scalar_prefetch = 0 : i64, scratch_operands = 1 : i64, tpu.core_type = #tpu.core_type<tc>, window_params = [{transform_indices = @transform_0, window_bounds = array<i64: 1, 1, 18, 18, 4>}, {pipeline_mode = #tpu.pipeline_mode<synchronous>, transform_indices = @transform_1, window_bounds = array<i64: 36, 16>}, {pipeline_mode = #tpu.pipeline_mode<synchronous>, transform_indices = @transform_2, window_bounds = array<i64: 1, 16>}, {pipeline_mode = #tpu.pipeline_mode<synchronous>, transform_indices = @transform_3, window_bounds = array<i64: 1, 16>}, {transform_indices = @transform_4, window_bounds = array<i64: 1, 16, 2, 16, 8>}]} {
    %c0 = arith.constant 0 : index
    %c0_0 = arith.constant 0 : index
    %c0_1 = arith.constant 0 : index
    %c0_2 = arith.constant 0 : index
    %c0_3 = arith.constant 0 : index
    %0 = vector.load %arg2[%c0, %c0_0, %c0_1, %c0_2, %c0_3] : memref<1x1x18x18x4xbf16, #tpu.memory_space<vmem>>, vector<1x1x18x18x4xbf16>
    %1 = vector.shape_cast %0 : vector<1x1x18x18x4xbf16> to vector<18x18x4xbf16>
    %2 = vector.extract_strided_slice %1 {offsets = [0, 0, 0], sizes = [16, 16, 4], strides = [1, 1, 1]} : vector<18x18x4xbf16> to vector<16x16x4xbf16>
    %3 = vector.shape_cast %2 : vector<16x16x4xbf16> to vector<256x4xbf16>
    %4 = vector.extract_strided_slice %1 {offsets = [0, 1, 0], sizes = [16, 16, 4], strides = [1, 1, 1]} : vector<18x18x4xbf16> to vector<16x16x4xbf16>
    %5 = vector.shape_cast %4 : vector<16x16x4xbf16> to vector<256x4xbf16>
    %6 = vector.extract_strided_slice %1 {offsets = [0, 2, 0], sizes = [16, 16, 4], strides = [1, 1, 1]} : vector<18x18x4xbf16> to vector<16x16x4xbf16>
    %7 = vector.shape_cast %6 : vector<16x16x4xbf16> to vector<256x4xbf16>
    %8 = tpu.concatenate %3, %5, %7 in 1 : vector<256x4xbf16>, vector<256x4xbf16>, vector<256x4xbf16> -> vector<256x12xbf16>
    %c0_4 = arith.constant 0 : index
    %c0_5 = arith.constant 0 : index
    %9 = vector.load %arg3[%c0_4, %c0_5] : memref<36x16xbf16, #tpu.memory_space<vmem>>, vector<12x16xbf16>
    %cst = arith.constant dense<0.000000e+00> : vector<256x16xf32>
    %10 = tpu.matmul %8, %9, %cst {dimension_numbers = #tpu.dot_dimension_numbers<[1], [0], [0], [1], [0, 0, 1, 1], [], []>} : vector<256x12xbf16>, vector<12x16xbf16>, vector<256x16xf32> -> vector<256x16xf32>
    %c0_6 = arith.constant 0 : index
    %c0_7 = arith.constant 0 : index
    %11 = vector.load %arg7[%c0_6, %c0_7] : memref<256x16xf32, #tpu.memory_space<vmem>>, vector<256x16xf32>
    tpu.vector_store %arg7[%c0_6, %c0_7], %10 {strides = array<i32>} : memref<256x16xf32, #tpu.memory_space<vmem>>, vector<256x16xf32>,
    %c0_8 = arith.constant 0 : index
    %c0_9 = arith.constant 0 : index
    %12 = vector.load %arg7[%c0_8, %c0_9] : memref<256x16xf32, #tpu.memory_space<vmem>>, vector<256x16xf32>
    %13 = vector.extract_strided_slice %1 {offsets = [1, 0, 0], sizes = [16, 16, 4], strides = [1, 1, 1]} : vector<18x18x4xbf16> to vector<16x16x4xbf16>
    %14 = vector.shape_cast %13 : vector<16x16x4xbf16> to vector<256x4xbf16>
    %15 = vector.extract_strided_slice %1 {offsets = [1, 1, 0], sizes = [16, 16, 4], strides = [1, 1, 1]} : vector<18x18x4xbf16> to vector<16x16x4xbf16>
    %16 = vector.shape_cast %15 : vector<16x16x4xbf16> to vector<256x4xbf16>
    %17 = vector.extract_strided_slice %1 {offsets = [1, 2, 0], sizes = [16, 16, 4], strides = [1, 1, 1]} : vector<18x18x4xbf16> to vector<16x16x4xbf16>
    %18 = vector.shape_cast %17 : vector<16x16x4xbf16> to vector<256x4xbf16>
    %19 = tpu.concatenate %14, %16, %18 in 1 : vector<256x4xbf16>, vector<256x4xbf16>, vector<256x4xbf16> -> vector<256x12xbf16>
    %c12 = arith.constant 12 : index
    %c0_10 = arith.constant 0 : index
    %20 = vector.load %arg3[%c12, %c0_10] : memref<36x16xbf16, #tpu.memory_space<vmem>>, vector<12x16xbf16>
    %cst_11 = arith.constant dense<0.000000e+00> : vector<256x16xf32>
    %21 = tpu.matmul %19, %20, %cst_11 {dimension_numbers = #tpu.dot_dimension_numbers<[1], [0], [0], [1], [0, 0, 1, 1], [], []>} : vector<256x12xbf16>, vector<12x16xbf16>, vector<256x16xf32> -> vector<256x16xf32>
    %22 = arith.addf %12, %21 : vector<256x16xf32>
    %c0_12 = arith.constant 0 : index
    %c0_13 = arith.constant 0 : index
    %23 = vector.load %arg7[%c0_12, %c0_13] : memref<256x16xf32, #tpu.memory_space<vmem>>, vector<256x16xf32>
    tpu.vector_store %arg7[%c0_12, %c0_13], %22 {strides = array<i32>} : memref<256x16xf32, #tpu.memory_space<vmem>>, vector<256x16xf32>,
    %c0_14 = arith.constant 0 : index
    %c0_15 = arith.constant 0 : index
    %24 = vector.load %arg7[%c0_14, %c0_15] : memref<256x16xf32, #tpu.memory_space<vmem>>, vector<256x16xf32>
    %25 = vector.extract_strided_slice %1 {offsets = [2, 0, 0], sizes = [16, 16, 4], strides = [1, 1, 1]} : vector<18x18x4xbf16> to vector<16x16x4xbf16>
    %26 = vector.shape_cast %25 : vector<16x16x4xbf16> to vector<256x4xbf16>
    %27 = vector.extract_strided_slice %1 {offsets = [2, 1, 0], sizes = [16, 16, 4], strides = [1, 1, 1]} : vector<18x18x4xbf16> to vector<16x16x4xbf16>
    %28 = vector.shape_cast %27 : vector<16x16x4xbf16> to vector<256x4xbf16>
    %29 = vector.extract_strided_slice %1 {offsets = [2, 2, 0], sizes = [16, 16, 4], strides = [1, 1, 1]} : vector<18x18x4xbf16> to vector<16x16x4xbf16>
    %30 = vector.shape_cast %29 : vector<16x16x4xbf16> to vector<256x4xbf16>
    %31 = tpu.concatenate %26, %28, %30 in 1 : vector<256x4xbf16>, vector<256x4xbf16>, vector<256x4xbf16> -> vector<256x12xbf16>
    %c24 = arith.constant 24 : index
    %c0_16 = arith.constant 0 : index
    %32 = vector.load %arg3[%c24, %c0_16] : memref<36x16xbf16, #tpu.memory_space<vmem>>, vector<12x16xbf16>
    %cst_17 = arith.constant dense<0.000000e+00> : vector<256x16xf32>
    %33 = tpu.matmul %31, %32, %cst_17 {dimension_numbers = #tpu.dot_dimension_numbers<[1], [0], [0], [1], [0, 0, 1, 1], [], []>} : vector<256x12xbf16>, vector<12x16xbf16>, vector<256x16xf32> -> vector<256x16xf32>
    %34 = arith.addf %24, %33 : vector<256x16xf32>
    %c0_18 = arith.constant 0 : index
    %c0_19 = arith.constant 0 : index
    %35 = vector.load %arg4[%c0_18, %c0_19] : memref<1x16xf32, #tpu.memory_space<vmem>>, vector<1x16xf32>
    %36 = vector.broadcast %35 : vector<1x16xf32> to vector<256x16xf32>
    %37 = arith.addf %34, %36 : vector<256x16xf32>
    %cst_20 = arith.constant 0.000000e+00 : f32
    %38 = vector.broadcast %cst_20 : f32 to vector<256x16xf32>
    %39 = arith.cmpf oge, %37, %38 : vector<256x16xf32>
    %c0_21 = arith.constant 0 : index
    %c0_22 = arith.constant 0 : index
    %40 = vector.load %arg5[%c0_21, %c0_22] : memref<1x16xf32, #tpu.memory_space<vmem>>, vector<1x16xf32>
    %41 = vector.broadcast %40 : vector<1x16xf32> to vector<256x16xf32>
    %42 = arith.mulf %37, %41 : vector<256x16xf32>
    %43 = arith.select %39, %37, %42 : vector<256x16xi1>, vector<256x16xf32>
    %44 = arith.truncf %43 : vector<256x16xf32> to vector<256x16xbf16>
    %45 = vector.extract_strided_slice %44 {offsets = [0, 0], sizes = [256, 8], strides = [1, 1]} : vector<256x16xbf16> to vector<256x8xbf16>
    %46 = vector.shape_cast %45 : vector<256x8xbf16> to vector<16x16x8xbf16>
    %c0_23 = arith.constant 0 : index
    %c0_24 = arith.constant 0 : index
    %c0_25 = arith.constant 0 : index
    %c0_26 = arith.constant 0 : index
    %c0_27 = arith.constant 0 : index
    %47 = vector.load %arg6[%c0_23, %c0_24, %c0_25, %c0_26, %c0_27] : memref<1x16x2x16x8xbf16, #tpu.memory_space<vmem>>, vector<1x16x1x16x8xbf16>
    %48 = vector.shape_cast %47 : vector<1x16x1x16x8xbf16> to vector<16x16x8xbf16>
    %49 = vector.shape_cast %46 : vector<16x16x8xbf16> to vector<1x16x1x16x8xbf16>
    tpu.vector_store %arg6[%c0_23, %c0_24, %c0_25, %c0_26, %c0_27], %49 {strides = array<i32>} : memref<1x16x2x16x8xbf16, #tpu.memory_space<vmem>>, vector<1x16x1x16x8xbf16>,
    %50 = vector.extract_strided_slice %44 {offsets = [0, 8], sizes = [256, 8], strides = [1, 1]} : vector<256x16xbf16> to vector<256x8xbf16>
    %51 = vector.shape_cast %50 : vector<256x8xbf16> to vector<16x16x8xbf16>
    %c0_28 = arith.constant 0 : index
    %c0_29 = arith.constant 0 : index
    %c1 = arith.constant 1 : index
    %c0_30 = arith.constant 0 : index
    %c0_31 = arith.constant 0 : index
    %52 = vector.load %arg6[%c0_28, %c0_29, %c1, %c0_30, %c0_31] : memref<1x16x2x16x8xbf16, #tpu.memory_space<vmem>>, vector<1x16x1x16x8xbf16>
    %53 = vector.shape_cast %52 : vector<1x16x1x16x8xbf16> to vector<16x16x8xbf16>
    %54 = vector.shape_cast %51 : vector<16x16x8xbf16> to vector<1x16x1x16x8xbf16>
    tpu.vector_store %arg6[%c0_28, %c0_29, %c1, %c0_30, %c0_31], %54 {strides = array<i32>} : memref<1x16x2x16x8xbf16, #tpu.memory_space<vmem>>, vector<1x16x1x16x8xbf16>,
    return
  }
  func.func @transform_0(%arg0: i32, %arg1: i32) -> (i32, i32, i32, i32, i32) {
    %c0_i32 = arith.constant 0 : i32
    %c0_i32_0 = arith.constant 0 : i32
    %c0_i32_1 = arith.constant 0 : i32
    %c0_i32_2 = arith.constant 0 : i32
    return %arg0, %arg1, %c0_i32, %c0_i32_0, %c0_i32_1 : i32, i32, i32, i32, i32
  }
  func.func @transform_1(%arg0: i32, %arg1: i32) -> (i32, i32) {
    %c0_i32 = arith.constant 0 : i32
    %c0_i32_0 = arith.constant 0 : i32
    %c0_i32_1 = arith.constant 0 : i32
    return %c0_i32, %c0_i32_0 : i32, i32
  }
  func.func @transform_2(%arg0: i32, %arg1: i32) -> (i32, i32) {
    %c0_i32 = arith.constant 0 : i32
    %c0_i32_0 = arith.constant 0 : i32
    %c0_i32_1 = arith.constant 0 : i32
    return %c0_i32, %c0_i32_0 : i32, i32
  }
  func.func @transform_3(%arg0: i32, %arg1: i32) -> (i32, i32) {
    %c0_i32 = arith.constant 0 : i32
    %c0_i32_0 = arith.constant 0 : i32
    %c0_i32_1 = arith.constant 0 : i32
    return %c0_i32, %c0_i32_0 : i32, i32
  }
  func.func @transform_4(%arg0: i32, %arg1: i32) -> (i32, i32, i32, i32, i32) {
    %c0_i32 = arith.constant 0 : i32
    %c0_i32_0 = arith.constant 0 : i32
    %c0_i32_1 = arith.constant 0 : i32
    %c0_i32_2 = arith.constant 0 : i32
    return %arg0, %arg1, %c0_i32, %c0_i32_0, %c0_i32_1 : i32, i32, i32, i32, i32
  }
}

</mosaic_0001>

<llo_original>
// kernel: tile.8
$region0: #{tile.8}
  #allocation0 [shape = 's32[1]{0}', space=sflag, size = 0x4, scoped, tag = 'scoped memory for tile.8']
  %s0 = inlined_call_operand.vmem [shape: f32[4], index: 0, kind: input, shape index: {}]
  %s1 = inlined_call_operand.vmem [shape: f32[4,4], index: 1, kind: output, shape index: {}]
  // Predicated region
  $region2: #{tile.8} parent=0 // pred_check
    _
  $region3: #{tile.8} parent=0 // pred_check_branch
    %3 = sbr.rel (0) target = $region5
  $region4: #{tile.8} parent=0 // pred_region
    _
  $region5: #{tile.8} parent=0 // pred_fallthru
    _
  %v4 = vld [vmem:[%s0] ss:$0 sm:$0xff]
  %5 = vst [vmem:[%s1] sm:$0xf] %v4

// kernel: tile.9
$region0: #{tile.9}
  %s0 = inlined_call_operand.vmem [shape: f32[4,4], index: 0, kind: input, shape index: {}]
  %s1 = inlined_call_operand.hbm [shape: f32[1,16], index: 1, kind: output, shape index: {}]
  $region1: #{tile.9} parent=0
    #allocation0 [shape = 'u8[512]{0}', space=vmem, size = 0x400, scoped, tag = 'operand span for operand 1']
    #allocation1 [shape = 's32[1]{0}', space=sflag, size = 0x4, scoped, tag = 'scoped memory for tile.9']
    #allocation2 [shape = 'u8[4096]{0}', space=vmem, size = 0x1000, scoped, tag = 'scoped mem for output reshape']
    #allocation3 [shape = 'u8[4096]{0}', space=vmem, size = 0x1000, scoped, tag = 'scoped mem for input reshape']
    %2 = vsyncpa [#allocation1], 0
    %s4 = sshllo.u32 0, 4
    %v5 = vld [vmem:[%s0] sm:%s4]
    %6 = vst [vmem:[#allocation3] sm:%s4] %v5
    %v7 = vld [vmem:[#allocation3] sm:$0x1]
    %vm8 = vcmask 31744
    %9 = vst.msk [vmem:[#allocation2] sm:$0x1] %vm8, %v7
    %s10 = scalar_lea.vmem [#allocation3], 3
    %v11 = vld [vmem:[%s10] sm:$0x1]
    %12 = vrot.lane.b32.xlu0 %v11, 12
    %v13 = vpop.permute.xlu0 %12
    %vm14 = vcmask 130144
    %15 = vst.msk [vmem:[#allocation2] sm:$0x1] %vm14, %v13
    %s16 = scalar_lea.vmem [#allocation3], 2
    %v17 = vld [vmem:[%s16] sm:$0x1]
    %18 = vrot.lane.b32.xlu0 %v17, 8
    %v19 = vpop.permute.xlu0 %18
    %vm20 = vcmask 97344
    %21 = vst.msk [vmem:[#allocation2] sm:$0x1] %vm20, %v19
    %s22 = scalar_lea.vmem [#allocation3], 1
    %v23 = vld [vmem:[%s22] sm:$0x1]
    %24 = vrot.lane.b32.xlu0 %v23, 4
    %v25 = vpop.permute.xlu0 %24
    %vm26 = vcmask 64544
    %27 = vst.msk [vmem:[#allocation2] sm:$0x1] %vm26, %v25
    %s29 = sshllo.u32 0, 1
    %v31 = vld [vmem:[#allocation2] sm:%s29]
    %s32 = sshllo.u32 0, 1
    %33 = vst [vmem:[#allocation0] sm:%s32] %v31
    %s35 = ssub.s32 16, 16
    %36 = vsyncadd [#allocation1], %s35
    %s38 = sshll.u32 [#allocation0], 4
    %s39 = int_to_ptr.vmem [resolvable:$true] %s38
    %41 = dma.vmem_to_hbm [thread:$0]  %s39, 16, %s1, [#allocation1]
    %42 = dma.done [#allocation1], 16
    %43 = vsyncpa [#allocation1], 1

// kernel: upsample_block.1
$region0: #{upsample_block.1}
  #allocation0 [shape = 'u32[]', space=smem, size = 0x4, offset = 0x4, fixed_abs, tag = 'smem constant byte address 0x4 - core index']
  #allocation1 [shape = 'u32[144,128]{1,0:T(1,128)}', space=vmem, size = 0x12000, scoped, tag = 'internal scratch']
  #allocation2 [shape = 'f32[256,16]{1,0:T(8,128)}', space=vmem, size = 0x20000, scoped, tag = 'scratch operand']
  %s0 = inlined_call_operand.hbm [shape: bf16[2,1,18,18,4], index: 0, kind: input, shape index: {}]
  %s1 = inlined_call_operand.hbm [shape: bf16[36,16], index: 1, kind: input, shape index: {}]
  %s2 = inlined_call_operand.hbm [shape: f32[1,16], index: 2, kind: input, shape index: {}]
  %s3 = inlined_call_operand.hbm [shape: f32[1,16], index: 3, kind: input, shape index: {}]
  %s4 = inlined_call_operand.hbm [shape: bf16[2,16,2,16,8], index: 4, kind: output, shape index: {}]
  %s5 = sld [smem:[#allocation0]]
  $region65: #{upsample_block.1} parent=0
    _
  %s7 = ssub.s32 1, %s5
  %s8 = scalar_select 0, %s7, %s5
  $region1: #{upsample_block.1} parent=0
    #allocation3 [shape = 'u8[221184]{0}', space=vmem, size = 0x36000, scoped, tag = 'input window, operand 0']
    #allocation4 [shape = 's32[2]{0}', space=sflag, size = 0x8, scoped, tag = 'scoped memory for upsample_block.1']
    #allocation5 [shape = 's32[2]{0}', space=sflag, size = 0x8, scoped, tag = 'scoped memory for upsample_block.1']
    #allocation6 [shape = 'u8[10240]{0}', space=vmem, size = 0x2800, scoped, tag = 'input window, operand 1, single buffered']
    #allocation7 [shape = 's32[1]{0}', space=sflag, size = 0x4, scoped, tag = 'scoped memory for upsample_block.1']
    #allocation8 [shape = 'u8[512]{0}', space=vmem, size = 0x400, scoped, tag = 'input window, operand 2, single buffered']
    #allocation9 [shape = 'u8[512]{0}', space=vmem, size = 0x400, scoped, tag = 'input window, operand 3, single buffered']
    #allocation10 [shape = 's32[1]{0}', space=sflag, size = 0x4, scoped, tag = 'scoped memory for upsample_block.1']
    #allocation11 [shape = 'u8[262144]{0}', space=vmem, size = 0x40000, scoped, tag = 'output window, operand 0']
    %9 = vsyncpa [#allocation4], 0
    %s10 = scalar_lea.sflag [#allocation4], 1
    %11 = vsyncpa %s10, 0
    %12 = vsyncpa [#allocation7], 0
    %13 = vsyncpa [#allocation10], 0
    %14 = vsyncpa [#allocation5], 0
    %s15 = scalar_lea.sflag [#allocation5], 1
    %16 = vsyncpa %s15, 0
    loop: start=0, step=1, limit=4
    $region2: #{upsample_block.1} parent=1 // loop_pre_header
      _
    $region3: #{upsample_block.1} parent=1 // loop_header
      %s18 = sphi 0, %s22
      %p19 = scmp.ge.s32.totalorder %s18, 4
      %s25 = sphi 0, %s37
      %s26 = sphi 0, %s33
      %s27 = sphi 0, %s25
      %s28 = sphi 0, %s26
      %s29 = sphi 0, %s27
      %s30 = sphi 0, %s28
      %s42 = sphi 0, %s44
      %s45 = sphi 0, %s42
      %s46 = sphi 0, %s45
      %s62 = sphi 0, %s46
      %s66 = sphi 0, %s66
      %s68 = sphi 0, %s66
      %s69 = sphi 0, %s68
      %s83 = sphi 0, %s69
      %s87 = sphi 0, %s87
      %s89 = sphi 0, %s87
      %s90 = sphi 0, %s89
      %s104 = sphi 0, %s90
      %s108 = sphi 0, %s108
      %s110 = sphi 0, %s108
      %s111 = sphi 0, %s110
      %s125 = sphi 0, %s111
      %s133 = sphi 0, %s135
      %s136 = sphi 0, %s133
      %s137 = sphi 0, %s136
      %s153 = sphi 0, %s137
    $region4: #{upsample_block.1} parent=1 // loop_header_branch
      %21 = sbr.rel (%p19) target = $region8
    $region5: #{upsample_block.1} parent=1 // loop_body
      %s23 = ssub.s32 %s18, 1
      %s24 = ssub.s32 %s18, 2
      %s31 = sadd.s32 1, %s26
      %p32 = scmp.ge.s32.totalorder %s31, 1
      %s33 = scalar_select %p32, 0, %s31
      %s34 = sadd.s32 1, %s25
      %s35 = scalar_select %p32, %s34, %s25
      %p36 = scmp.ge.s32.totalorder %s35, 2
      %s37 = scalar_select %p36, 0, %s35
      %s38 = ssub.s32 %s25, %s37
      %s39 = ssub.s32 %s26, %s33
      %s40 = sor.u32 %s38, %s39
      %p41 = scmp.eq.s32.totalorder %s40, 0
      %s43 = sadd.s32 %s42, 1
      %s44 = scalar_select %p41, %s42, %s43
      %p47 = pneg %p41
      %p48 = scmp.eq.s32.totalorder %s18, 1
      %p49 = por %p47, %p48
      %p50 = scmp.ne.s32.totalorder %s42, %s45
      %p51 = scmp.eq.s32.totalorder %s18, 0
      %p52 = por %p50, %p51
      %p53 = scmp.ne.s32.totalorder %s42, %s45
      %p54 = scmp.eq.s32.totalorder %s23, 1
      %p55 = por %p53, %p54
      %p56 = scmp.ne.s32.totalorder %s45, %s46
      %p57 = scmp.eq.s32.totalorder %s23, 0
      %p58 = por %p56, %p57
      %p59 = scmp.ne.s32.totalorder %s45, %s46
      %p60 = scmp.eq.s32.totalorder %s24, 1
      %p61 = por %p59, %p60
      %p63 = scmp.ne.s32.totalorder %s46, %s62
      %p64 = scmp.eq.s32.totalorder %s24, 0
      %p65 = por %p63, %p64
      %s67 = sadd.s32 %s66, 1
      %p70 = scmp.eq.s32.totalorder %s18, 1
      %p71 = scmp.ne.s32.totalorder %s66, %s68
      %p72 = scmp.eq.s32.totalorder %s18, 0
      %p73 = por %p71, %p72
      %p74 = scmp.ne.s32.totalorder %s66, %s68
      %p75 = scmp.eq.s32.totalorder %s23, 1
      %p76 = por %p74, %p75
      %p77 = scmp.ne.s32.totalorder %s68, %s69
      %p78 = scmp.eq.s32.totalorder %s23, 0
      %p79 = por %p77, %p78
      %p80 = scmp.ne.s32.totalorder %s68, %s69
      %p81 = scmp.eq.s32.totalorder %s24, 1
      %p82 = por %p80, %p81
      %p84 = scmp.ne.s32.totalorder %s69, %s83
      %p85 = scmp.eq.s32.totalorder %s24, 0
      %p86 = por %p84, %p85
      %s88 = sadd.s32 %s87, 1
      %p91 = scmp.eq.s32.totalorder %s18, 1
      %p92 = scmp.ne.s32.totalorder %s87, %s89
      %p93 = scmp.eq.s32.totalorder %s18, 0
      %p94 = por %p92, %p93
      %p95 = scmp.ne.s32.totalorder %s87, %s89
      %p96 = scmp.eq.s32.totalorder %s23, 1
      %p97 = por %p95, %p96
      %p98 = scmp.ne.s32.totalorder %s89, %s90
      %p99 = scmp.eq.s32.totalorder %s23, 0
      %p100 = por %p98, %p99
      %p101 = scmp.ne.s32.totalorder %s89, %s90
      %p102 = scmp.eq.s32.totalorder %s24, 1
      %p103 = por %p101, %p102
      %p105 = scmp.ne.s32.totalorder %s90, %s104
      %p106 = scmp.eq.s32.totalorder %s24, 0
      %p107 = por %p105, %p106
      %s109 = sadd.s32 %s108, 1
      %p112 = scmp.eq.s32.totalorder %s18, 1
      %p113 = scmp.ne.s32.totalorder %s108, %s110
      %p114 = scmp.eq.s32.totalorder %s18, 0
      %p115 = por %p113, %p114
      %p116 = scmp.ne.s32.totalorder %s108, %s110
      %p117 = scmp.eq.s32.totalorder %s23, 1
      %p118 = por %p116, %p117
      %p119 = scmp.ne.s32.totalorder %s110, %s111
      %p120 = scmp.eq.s32.totalorder %s23, 0
      %p121 = por %p119, %p120
      %p122 = scmp.ne.s32.totalorder %s110, %s111
      %p123 = scmp.eq.s32.totalorder %s24, 1
      %p124 = por %p122, %p123
      %p126 = scmp.ne.s32.totalorder %s111, %s125
      %p127 = scmp.eq.s32.totalorder %s24, 0
      %p128 = por %p126, %p127
      %s129 = ssub.s32 %s25, %s37
      %s130 = ssub.s32 %s26, %s33
      %s131 = sor.u32 %s129, %s130
      %p132 = scmp.eq.s32.totalorder %s131, 0
      %s134 = sadd.s32 %s133, 1
      %s135 = scalar_select %p132, %s133, %s134
      %p138 = pneg %p132
      %p139 = scmp.eq.s32.totalorder %s18, 1
      %p140 = por %p138, %p139
      %p141 = scmp.ne.s32.totalorder %s133, %s136
      %p142 = scmp.eq.s32.totalorder %s18, 0
      %p143 = por %p141, %p142
      %p144 = scmp.ne.s32.totalorder %s133, %s136
      %p145 = scmp.eq.s32.totalorder %s23, 1
      %p146 = por %p144, %p145
      %p147 = scmp.ne.s32.totalorder %s136, %s137
      %p148 = scmp.eq.s32.totalorder %s23, 0
      %p149 = por %p147, %p148
      %p150 = scmp.ne.s32.totalorder %s136, %s137
      %p151 = scmp.eq.s32.totalorder %s24, 1
      %p152 = por %p150, %p151
      %p154 = scmp.ne.s32.totalorder %s137, %s153
      %p155 = scmp.eq.s32.totalorder %s24, 0
      %p156 = por %p154, %p155
      %p157 = scmp.le.s32.totalorder 1, %s18
      %p158 = scmp.lt.s32.totalorder %s18, 3
      %p159 = pnand %p157, %p158
      %p160 = pneg %p159
      // Predicated region
      $region9: #{upsample_block.1} parent=5 // pred_check
        _
      $region10: #{upsample_block.1} parent=5 // pred_check_branch
        %162 = sbr.rel (%p159) target = $region12
      $region11: #{upsample_block.1} parent=5 // pred_region
        %s163 = ssub.s32 %s18, 1
        // Predicated region
        $region13: #{upsample_block.1} parent=11 // pred_check
          %p164 = pneg %p79
        $region14: #{upsample_block.1} parent=11 // pred_check_branch
          %166 = sbr.rel (%p164) target = $region16
        $region15: #{upsample_block.1} parent=11 // pred_region
          %s168 = ssub.s32 320, 320
          %169 = vsyncadd [#allocation7], %s168
          %s170 = sshll.u32 [#allocation6], 4
          %s171 = int_to_ptr.vmem [resolvable:$true] %s170
          %176 = dma.hbm_to_vmem [thread:$0]  %s1, 320, %s171, [#allocation7], 64, 64, 4
        $region16: #{upsample_block.1} parent=11 // pred_fallthru
          _
        // Predicated region
        $region17: #{upsample_block.1} parent=11 // pred_check
          %p177 = pneg %p100
        $region18: #{upsample_block.1} parent=11 // pred_check_branch
          %179 = sbr.rel (%p177) target = $region20
        $region19: #{upsample_block.1} parent=11 // pred_region
          %s181 = ssub.s32 16, 16
          %182 = vsyncadd [#allocation7], %s181
          %s184 = sshll.u32 [#allocation8], 4
          %s185 = int_to_ptr.vmem [resolvable:$true] %s184
          %187 = dma.hbm_to_vmem [thread:$0]  %s2, 16, %s185, [#allocation7]
        $region20: #{upsample_block.1} parent=11 // pred_fallthru
          _
        // Predicated region
        $region21: #{upsample_block.1} parent=11 // pred_check
          %p188 = pneg %p121
        $region22: #{upsample_block.1} parent=11 // pred_check_branch
          %190 = sbr.rel (%p188) target = $region24
        $region23: #{upsample_block.1} parent=11 // pred_region
          %s192 = ssub.s32 16, 16
          %193 = vsyncadd [#allocation10], %s192
          %s195 = sshll.u32 [#allocation9], 4
          %s196 = int_to_ptr.vmem [resolvable:$true] %s195
          %198 = dma.hbm_to_vmem [thread:$0]  %s3, 16, %s196, [#allocation10]
        $region24: #{upsample_block.1} parent=11 // pred_fallthru
          _
      $region12: #{upsample_block.1} parent=5 // pred_fallthru
        _
      %p199 = scmp.lt.s32.totalorder %s18, 2
      // Predicated region
      $region25: #{upsample_block.1} parent=5 // pred_check
        %p200 = pneg %p199
      $region26: #{upsample_block.1} parent=5 // pred_check_branch
        %202 = sbr.rel (%p200) target = $region28
      $region27: #{upsample_block.1} parent=5 // pred_region
        // Predicated region
        $region29: #{upsample_block.1} parent=27 // pred_check
          %p203 = pneg %p52
        $region30: #{upsample_block.1} parent=27 // pred_check_branch
          %205 = sbr.rel (%p203) target = $region32
        $region31: #{upsample_block.1} parent=27 // pred_region
          %s206 = sand.u32 %s42, 1
          %s207 = scalar_lea.sflag [#allocation4], %s206
          %s208 = sand.u32 %s42, 1
          %s209 = smul.addr %s208, 216
          %s210 = scalar_lea.vmem [#allocation3], %s209
          %s212 = ssub.s32 3456, 3456
          %213 = vsyncadd %s207, %s212
          %s214 = smul.addr %s26, 54
          %s215 = smul.addr %s25, 54
          %s216 = sadd.s32 %s214, %s215
          %s217 = smul.addr %s216, 64
          %s218 = scalar_lea.hbm %s0, %s217
          %s219 = sshll.u32 %s210, 4
          %s220 = int_to_ptr.vmem [resolvable:$true] %s219
          %225 = dma.hbm_to_vmem [thread:$0]  %s218, 3456, %s220, %s207, 64, 64, 4
        $region32: #{upsample_block.1} parent=27 // pred_fallthru
          _
      $region28: #{upsample_block.1} parent=5 // pred_fallthru
        _
      %p226 = scmp.le.s32.totalorder 1, %s18
      %p227 = scmp.lt.s32.totalorder %s18, 3
      %p228 = pnand %p226, %p227
      %p229 = pneg %p228
      // Predicated region
      $region33: #{upsample_block.1} parent=5 // pred_check
        _
      $region34: #{upsample_block.1} parent=5 // pred_check_branch
        %231 = sbr.rel (%p228) target = $region36
      $region35: #{upsample_block.1} parent=5 // pred_region
        %s232 = ssub.s32 %s18, 1
        %s233 = sand.u32 %s45, 1
        %s234 = scalar_lea.sflag [#allocation4], %s233
        %s235 = sand.u32 %s45, 1
        %s236 = smul.addr %s235, 216
        %s237 = scalar_lea.vmem [#allocation3], %s236
        // Predicated region
        $region37: #{upsample_block.1} parent=35 // pred_check
          %p238 = pneg %p58
        $region38: #{upsample_block.1} parent=35 // pred_check_branch
          %240 = sbr.rel (%p238) target = $region40
        $region39: #{upsample_block.1} parent=35 // pred_region
          %241 = dma.done %s234, 3456
        $region40: #{upsample_block.1} parent=35 // pred_fallthru
          _
        // Predicated region
        $region41: #{upsample_block.1} parent=35 // pred_check
          %p242 = pneg %p79
        $region42: #{upsample_block.1} parent=35 // pred_check_branch
          %244 = sbr.rel (%p242) target = $region44
        $region43: #{upsample_block.1} parent=35 // pred_region
          %245 = dma.done [#allocation7], 320
        $region44: #{upsample_block.1} parent=35 // pred_fallthru
          _
        // Predicated region
        $region45: #{upsample_block.1} parent=35 // pred_check
          %p246 = pneg %p100
        $region46: #{upsample_block.1} parent=35 // pred_check_branch
          %248 = sbr.rel (%p246) target = $region48
        $region47: #{upsample_block.1} parent=35 // pred_region
          %249 = dma.done [#allocation7], 16
        $region48: #{upsample_block.1} parent=35 // pred_fallthru
          _
        // Predicated region
        $region49: #{upsample_block.1} parent=35 // pred_check
          %p250 = pneg %p121
        $region50: #{upsample_block.1} parent=35 // pred_check_branch
          %252 = sbr.rel (%p250) target = $region52
        $region51: #{upsample_block.1} parent=35 // pred_region
          %253 = dma.done [#allocation10], 16
        $region52: #{upsample_block.1} parent=35 // pred_fallthru
          _
        %s254 = sand.u32 %s45, 1
        %s255 = scalar_lea.sflag [#allocation4], %s254
        %s256 = sand.u32 %s45, 1
        %s257 = smul.addr %s256, 216
        %s258 = scalar_lea.vmem [#allocation3], %s257
        %p259 = pneg %p58
        %p260 = pneg %p55
        %p261 = pneg %p79
        %p262 = pneg %p76
        %p263 = pneg %p100
        %p264 = pneg %p97
        %p265 = pneg %p121
        %p266 = pneg %p118
        %p267 = pneg %p149
        %p268 = pneg %p146
        %s269 = sand.u32 %s136, 1
        %s270 = scalar_lea.sflag [#allocation5], %s269
        %s271 = sand.u32 %s136, 1
        %s272 = smul.addr %s271, 256
        %s273 = scalar_lea.vmem [#allocation11], %s272
        %s274 = smul.u32 16, %s28
        %v276 = vld [vmem:[%s237] sm:$0xf]
        %v277 = vld [vmem:[%s237 + $0x4] sm:$0xf]
        %v278 = vld [vmem:[%s237 + $0x8] sm:$0x1]
        %v279 = vld [vmem:[%s237 + $0xc] sm:$0xf]
        %v280 = vld [vmem:[%s237 + $0x10] sm:$0xf]
        %v281 = vld [vmem:[%s237 + $0x14] sm:$0x1]
        %v282 = vld [vmem:[%s237 + $0x18] sm:$0xf]
        %v283 = vld [vmem:[%s237 + $0x1c] sm:$0xf]
        %v284 = vld [vmem:[%s237 + $0x20] sm:$0x1]
        %v285 = vld [vmem:[%s237 + $0x24] sm:$0xf]
        %v286 = vld [vmem:[%s237 + $0x28] sm:$0xf]
        %v287 = vld [vmem:[%s237 + $0x2c] sm:$0x1]
        %v288 = vld [vmem:[%s237 + $0x30] sm:$0xf]
        %v289 = vld [vmem:[%s237 + $0x34] sm:$0xf]
        %v290 = vld [vmem:[%s237 + $0x38] sm:$0x1]
        %v291 = vld [vmem:[%s237 + $0x3c] sm:$0xf]
        %v292 = vld [vmem:[%s237 + $0x40] sm:$0xf]
        %v293 = vld [vmem:[%s237 + $0x44] sm:$0x1]
        %v294 = vld [vmem:[%s237 + $0x48] sm:$0xf]
        %v295 = vld [vmem:[%s237 + $0x4c] sm:$0xf]
        %v296 = vld [vmem:[%s237 + $0x50] sm:$0x1]
        %v297 = vld [vmem:[%s237 + $0x54] sm:$0xf]
        %v298 = vld [vmem:[%s237 + $0x58] sm:$0xf]
        %v299 = vld [vmem:[%s237 + $0x5c] sm:$0x1]
        %v300 = vld [vmem:[%s237 + $0x60] sm:$0xf]
        %v301 = vld [vmem:[%s237 + $0x64] sm:$0xf]
        %v302 = vld [vmem:[%s237 + $0x68] sm:$0x1]
        %v303 = vld [vmem:[%s237 + $0x6c] sm:$0xf]
        %v304 = vld [vmem:[%s237 + $0x70] sm:$0xf]
        %v305 = vld [vmem:[%s237 + $0x74] sm:$0x1]
        %v306 = vld [vmem:[%s237 + $0x78] sm:$0xf]
        %v307 = vld [vmem:[%s237 + $0x7c] sm:$0xf]
        %v308 = vld [vmem:[%s237 + $0x80] sm:$0x1]
        %v309 = vld [vmem:[%s237 + $0x84] sm:$0xf]
        %v310 = vld [vmem:[%s237 + $0x88] sm:$0xf]
        %v311 = vld [vmem:[%s237 + $0x8c] sm:$0x1]
        %v312 = vld [vmem:[%s237 + $0x90] sm:$0xf]
        %v313 = vld [vmem:[%s237 + $0x94] sm:$0xf]
        %v314 = vld [vmem:[%s237 + $0x98] sm:$0x1]
        %v315 = vld [vmem:[%s237 + $0x9c] sm:$0xf]
        %v316 = vld [vmem:[%s237 + $0xa0] sm:$0xf]
        %v317 = vld [vmem:[%s237 + $0xa4] sm:$0x1]
        %v318 = vld [vmem:[%s237 + $0xa8] sm:$0xf]
        %v319 = vld [vmem:[%s237 + $0xac] sm:$0xf]
        %v320 = vld [vmem:[%s237 + $0xb0] sm:$0x1]
        %v321 = vld [vmem:[%s237 + $0xb4] sm:$0xf]
        %v322 = vld [vmem:[%s237 + $0xb8] sm:$0xf]
        %v323 = vld [vmem:[%s237 + $0xbc] sm:$0x1]
        %v324 = vld [vmem:[%s237 + $0xc0] sm:$0xf]
        %v325 = vld [vmem:[%s237 + $0xc4] sm:$0xf]
        %v326 = vld [vmem:[%s237 + $0xc8] sm:$0x1]
        %v327 = vld [vmem:[%s237 + $0xcc] sm:$0xf]
        %v328 = vld [vmem:[%s237 + $0xd0] sm:$0xf]
        %v329 = vld [vmem:[%s237 + $0xd4] sm:$0x1]
        %vm330 = vsmask.f32 3328
        %vm331 = vsmask.f32 7440
        %vm332 = vmor %vm330, %vm331
        %v334 = vshrl.u32 %v276, 16
        %v336 = vrot.slane %v334, 4
        %v337 = vshll.u32 %v276, 16
        %v339 = vrot.slane %v337, 5
        %v340 = vor.u32 %v336, %v339
        %v341 = vrot.slane %v340, 4
        %v343 = vshll.u32 %v277, 16
        %v345 = vrot.slane %v343, 5
        %v346 = vsel %vm332, %v341, %v345
        %v347 = vshrl.u32 %v277, 16
        %v349 = vrot.slane %v347, 4
        %v350 = vor.u32 %v349, %v345
        %v351 = vrot.slane %v350, 4
        %v353 = vshll.u32 %v278, 16
        %v355 = vrot.slane %v353, 5
        %v356 = vsel %vm332, %v351, %v355
        %v358 = vshrl.u32 %v279, 16
        %v360 = vrot.slane %v358, 4
        %v361 = vshll.u32 %v279, 16
        %v363 = vrot.slane %v361, 5
        %v364 = vor.u32 %v360, %v363
        %v365 = vrot.slane %v364, 4
        %v367 = vshll.u32 %v280, 16
        %v369 = vrot.slane %v367, 5
        %v370 = vsel %vm332, %v365, %v369
        %v371 = vshrl.u32 %v280, 16
        %v373 = vrot.slane %v371, 4
        %v374 = vor.u32 %v373, %v369
        %v375 = vrot.slane %v374, 4
        %v377 = vshll.u32 %v281, 16
        %v379 = vrot.slane %v377, 5
        %v380 = vsel %vm332, %v375, %v379
        %v382 = vshrl.u32 %v282, 16
        %v384 = vrot.slane %v382, 4
        %v385 = vshll.u32 %v282, 16
        %v387 = vrot.slane %v385, 5
        %v388 = vor.u32 %v384, %v387
        %v389 = vrot.slane %v388, 4
        %v391 = vshll.u32 %v283, 16
        %v393 = vrot.slane %v391, 5
        %v394 = vsel %vm332, %v389, %v393
        %v395 = vshrl.u32 %v283, 16
        %v397 = vrot.slane %v395, 4
        %v398 = vor.u32 %v397, %v393
        %v399 = vrot.slane %v398, 4
        %v401 = vshll.u32 %v284, 16
        %v403 = vrot.slane %v401, 5
        %v404 = vsel %vm332, %v399, %v403
        %v406 = vshrl.u32 %v285, 16
        %v408 = vrot.slane %v406, 4
        %v409 = vshll.u32 %v285, 16
        %v411 = vrot.slane %v409, 5
        %v412 = vor.u32 %v408, %v411
        %v413 = vrot.slane %v412, 4
        %v415 = vshll.u32 %v286, 16
        %v417 = vrot.slane %v415, 5
        %v418 = vsel %vm332, %v413, %v417
        %v419 = vshrl.u32 %v286, 16
        %v421 = vrot.slane %v419, 4
        %v422 = vor.u32 %v421, %v417
        %v423 = vrot.slane %v422, 4
        %v425 = vshll.u32 %v287, 16
        %v427 = vrot.slane %v425, 5
        %v428 = vsel %vm332, %v423, %v427
        %v430 = vshrl.u32 %v288, 16
        %v432 = vrot.slane %v430, 4
        %v433 = vshll.u32 %v288, 16
        %v435 = vrot.slane %v433, 5
        %v436 = vor.u32 %v432, %v435
        %v437 = vrot.slane %v436, 4
        %v439 = vshll.u32 %v289, 16
        %v441 = vrot.slane %v439, 5
        %v442 = vsel %vm332, %v437, %v441
        %v443 = vshrl.u32 %v289, 16
        %v445 = vrot.slane %v443, 4
        %v446 = vor.u32 %v445, %v441
        %v447 = vrot.slane %v446, 4
        %v449 = vshll.u32 %v290, 16
        %v451 = vrot.slane %v449, 5
        %v452 = vsel %vm332, %v447, %v451
        %v454 = vshrl.u32 %v291, 16
        %v456 = vrot.slane %v454, 4
        %v457 = vshll.u32 %v291, 16
        %v459 = vrot.slane %v457, 5
        %v460 = vor.u32 %v456, %v459
        %v461 = vrot.slane %v460, 4
        %v463 = vshll.u32 %v292, 16
        %v465 = vrot.slane %v463, 5
        %v466 = vsel %vm332, %v461, %v465
        %v467 = vshrl.u32 %v292, 16
        %v469 = vrot.slane %v467, 4
        %v470 = vor.u32 %v469, %v465
        %v471 = vrot.slane %v470, 4
        %v473 = vshll.u32 %v293, 16
        %v475 = vrot.slane %v473, 5
        %v476 = vsel %vm332, %v471, %v475
        %v478 = vshrl.u32 %v294, 16
        %v480 = vrot.slane %v478, 4
        %v481 = vshll.u32 %v294, 16
        %v483 = vrot.slane %v481, 5
        %v484 = vor.u32 %v480, %v483
        %v485 = vrot.slane %v484, 4
        %v487 = vshll.u32 %v295, 16
        %v489 = vrot.slane %v487, 5
        %v490 = vsel %vm332, %v485, %v489
        %v491 = vshrl.u32 %v295, 16
        %v493 = vrot.slane %v491, 4
        %v494 = vor.u32 %v493, %v489
        %v495 = vrot.slane %v494, 4
        %v497 = vshll.u32 %v296, 16
        %v499 = vrot.slane %v497, 5
        %v500 = vsel %vm332, %v495, %v499
        %v502 = vshrl.u32 %v297, 16
        %v504 = vrot.slane %v502, 4
        %v505 = vshll.u32 %v297, 16
        %v507 = vrot.slane %v505, 5
        %v508 = vor.u32 %v504, %v507
        %v509 = vrot.slane %v508, 4
        %v511 = vshll.u32 %v298, 16
        %v513 = vrot.slane %v511, 5
        %v514 = vsel %vm332, %v509, %v513
        %v515 = vshrl.u32 %v298, 16
        %v517 = vrot.slane %v515, 4
        %v518 = vor.u32 %v517, %v513
        %v519 = vrot.slane %v518, 4
        %v521 = vshll.u32 %v299, 16
        %v523 = vrot.slane %v521, 5
        %v524 = vsel %vm332, %v519, %v523
        %v526 = vshrl.u32 %v300, 16
        %v528 = vrot.slane %v526, 4
        %v529 = vshll.u32 %v300, 16
        %v531 = vrot.slane %v529, 5
        %v532 = vor.u32 %v528, %v531
        %v533 = vrot.slane %v532, 4
        %v535 = vshll.u32 %v301, 16
        %v537 = vrot.slane %v535, 5
        %v538 = vsel %vm332, %v533, %v537
        %v539 = vshrl.u32 %v301, 16
        %v541 = vrot.slane %v539, 4
        %v542 = vor.u32 %v541, %v537
        %v543 = vrot.slane %v542, 4
        %v545 = vshll.u32 %v302, 16
        %v547 = vrot.slane %v545, 5
        %v548 = vsel %vm332, %v543, %v547
        %v550 = vshrl.u32 %v303, 16
        %v552 = vrot.slane %v550, 4
        %v553 = vshll.u32 %v303, 16
        %v555 = vrot.slane %v553, 5
        %v556 = vor.u32 %v552, %v555
        %v557 = vrot.slane %v556, 4
        %v559 = vshll.u32 %v304, 16
        %v561 = vrot.slane %v559, 5
        %v562 = vsel %vm332, %v557, %v561
        %v563 = vshrl.u32 %v304, 16
        %v565 = vrot.slane %v563, 4
        %v566 = vor.u32 %v565, %v561
        %v567 = vrot.slane %v566, 4
        %v569 = vshll.u32 %v305, 16
        %v571 = vrot.slane %v569, 5
        %v572 = vsel %vm332, %v567, %v571
        %v574 = vshrl.u32 %v306, 16
        %v576 = vrot.slane %v574, 4
        %v577 = vshll.u32 %v306, 16
        %v579 = vrot.slane %v577, 5
        %v580 = vor.u32 %v576, %v579
        %v581 = vrot.slane %v580, 4
        %v583 = vshll.u32 %v307, 16
        %v585 = vrot.slane %v583, 5
        %v586 = vsel %vm332, %v581, %v585
        %v587 = vshrl.u32 %v307, 16
        %v589 = vrot.slane %v587, 4
        %v590 = vor.u32 %v589, %v585
        %v591 = vrot.slane %v590, 4
        %v593 = vshll.u32 %v308, 16
        %v595 = vrot.slane %v593, 5
        %v596 = vsel %vm332, %v591, %v595
        %v598 = vshrl.u32 %v309, 16
        %v600 = vrot.slane %v598, 4
        %v601 = vshll.u32 %v309, 16
        %v603 = vrot.slane %v601, 5
        %v604 = vor.u32 %v600, %v603
        %v605 = vrot.slane %v604, 4
        %v607 = vshll.u32 %v310, 16
        %v609 = vrot.slane %v607, 5
        %v610 = vsel %vm332, %v605, %v609
        %v611 = vshrl.u32 %v310, 16
        %v613 = vrot.slane %v611, 4
        %v614 = vor.u32 %v613, %v609
        %v615 = vrot.slane %v614, 4
        %v617 = vshll.u32 %v311, 16
        %v619 = vrot.slane %v617, 5
        %v620 = vsel %vm332, %v615, %v619
        %v622 = vshrl.u32 %v312, 16
        %v624 = vrot.slane %v622, 4
        %v625 = vshll.u32 %v312, 16
        %v627 = vrot.slane %v625, 5
        %v628 = vor.u32 %v624, %v627
        %v629 = vrot.slane %v628, 4
        %v631 = vshll.u32 %v313, 16
        %v633 = vrot.slane %v631, 5
        %v634 = vsel %vm332, %v629, %v633
        %v635 = vshrl.u32 %v313, 16
        %v637 = vrot.slane %v635, 4
        %v638 = vor.u32 %v637, %v633
        %v639 = vrot.slane %v638, 4
        %v641 = vshll.u32 %v314, 16
        %v643 = vrot.slane %v641, 5
        %v644 = vsel %vm332, %v639, %v643
        %v646 = vshrl.u32 %v315, 16
        %v648 = vrot.slane %v646, 4
        %v649 = vshll.u32 %v315, 16
        %v651 = vrot.slane %v649, 5
        %v652 = vor.u32 %v648, %v651
        %v653 = vrot.slane %v652, 4
        %v655 = vshll.u32 %v316, 16
        %v657 = vrot.slane %v655, 5
        %v658 = vsel %vm332, %v653, %v657
        %v659 = vshrl.u32 %v316, 16
        %v661 = vrot.slane %v659, 4
        %v662 = vor.u32 %v661, %v657
        %v663 = vrot.slane %v662, 4
        %v665 = vshll.u32 %v317, 16
        %v667 = vrot.slane %v665, 5
        %v668 = vsel %vm332, %v663, %v667
        %v670 = vshrl.u32 %v318, 16
        %v672 = vrot.slane %v670, 4
        %v673 = vshll.u32 %v318, 16
        %v675 = vrot.slane %v673, 5
        %v676 = vor.u32 %v672, %v675
        %v677 = vrot.slane %v676, 4
        %v679 = vshll.u32 %v319, 16
        %v681 = vrot.slane %v679, 5
        %v682 = vsel %vm332, %v677, %v681
        %v683 = vshrl.u32 %v319, 16
        %v685 = vrot.slane %v683, 4
        %v686 = vor.u32 %v685, %v681
        %v687 = vrot.slane %v686, 4
        %v689 = vshll.u32 %v320, 16
        %v691 = vrot.slane %v689, 5
        %v692 = vsel %vm332, %v687, %v691
        %v694 = vshrl.u32 %v321, 16
        %v696 = vrot.slane %v694, 4
        %v697 = vshll.u32 %v321, 16
        %v699 = vrot.slane %v697, 5
        %v700 = vor.u32 %v696, %v699
        %v701 = vrot.slane %v700, 4
        %v703 = vshll.u32 %v322, 16
        %v705 = vrot.slane %v703, 5
        %v706 = vsel %vm332, %v701, %v705
        %v707 = vshrl.u32 %v322, 16
        %v709 = vrot.slane %v707, 4
        %v710 = vor.u32 %v709, %v705
        %v711 = vrot.slane %v710, 4
        %v713 = vshll.u32 %v323, 16
        %v715 = vrot.slane %v713, 5
        %v716 = vsel %vm332, %v711, %v715
        %vm765 = vcmask 1042432
        %vm766 = vcmask 1046532
        %vm767 = vmor %vm765, %vm766
        %v768 = vrot.slane %v276, 5
        %v769 = vrot.slane %v768, 4
        %v770 = vrot.slane %v277, 5
        %v771 = vsel %vm767, %v769, %v770
        %v772 = vrot.slane %v770, 4
        %v773 = vrot.slane %v278, 5
        %v774 = vsel %vm767, %v772, %v773
        %v775 = vrot.slane %v279, 5
        %v776 = vrot.slane %v775, 4
        %v777 = vrot.slane %v280, 5
        %v778 = vsel %vm767, %v776, %v777
        %v779 = vrot.slane %v777, 4
        %v780 = vrot.slane %v281, 5
        %v781 = vsel %vm767, %v779, %v780
        %v782 = vrot.slane %v282, 5
        %v783 = vrot.slane %v782, 4
        %v784 = vrot.slane %v283, 5
        %v785 = vsel %vm767, %v783, %v784
        %v786 = vrot.slane %v784, 4
        %v787 = vrot.slane %v284, 5
        %v788 = vsel %vm767, %v786, %v787
        %v789 = vrot.slane %v285, 5
        %v790 = vrot.slane %v789, 4
        %v791 = vrot.slane %v286, 5
        %v792 = vsel %vm767, %v790, %v791
        %v793 = vrot.slane %v791, 4
        %v794 = vrot.slane %v287, 5
        %v795 = vsel %vm767, %v793, %v794
        %v796 = vrot.slane %v288, 5
        %v797 = vrot.slane %v796, 4
        %v798 = vrot.slane %v289, 5
        %v799 = vsel %vm767, %v797, %v798
        %v800 = vrot.slane %v798, 4
        %v801 = vrot.slane %v290, 5
        %v802 = vsel %vm767, %v800, %v801
        %v803 = vrot.slane %v291, 5
        %v804 = vrot.slane %v803, 4
        %v805 = vrot.slane %v292, 5
        %v806 = vsel %vm767, %v804, %v805
        %v807 = vrot.slane %v805, 4
        %v808 = vrot.slane %v293, 5
        %v809 = vsel %vm767, %v807, %v808
        %v810 = vrot.slane %v294, 5
        %v811 = vrot.slane %v810, 4
        %v812 = vrot.slane %v295, 5
        %v813 = vsel %vm767, %v811, %v812
        %v814 = vrot.slane %v812, 4
        %v815 = vrot.slane %v296, 5
        %v816 = vsel %vm767, %v814, %v815
        %v817 = vrot.slane %v297, 5
        %v818 = vrot.slane %v817, 4
        %v819 = vrot.slane %v298, 5
        %v820 = vsel %vm767, %v818, %v819
        %v821 = vrot.slane %v819, 4
        %v822 = vrot.slane %v299, 5
        %v823 = vsel %vm767, %v821, %v822
        %v824 = vrot.slane %v300, 5
        %v825 = vrot.slane %v824, 4
        %v826 = vrot.slane %v301, 5
        %v827 = vsel %vm767, %v825, %v826
        %v828 = vrot.slane %v826, 4
        %v829 = vrot.slane %v302, 5
        %v830 = vsel %vm767, %v828, %v829
        %v831 = vrot.slane %v303, 5
        %v832 = vrot.slane %v831, 4
        %v833 = vrot.slane %v304, 5
        %v834 = vsel %vm767, %v832, %v833
        %v835 = vrot.slane %v833, 4
        %v836 = vrot.slane %v305, 5
        %v837 = vsel %vm767, %v835, %v836
        %v838 = vrot.slane %v306, 5
        %v839 = vrot.slane %v838, 4
        %v840 = vrot.slane %v307, 5
        %v841 = vsel %vm767, %v839, %v840
        %v842 = vrot.slane %v840, 4
        %v843 = vrot.slane %v308, 5
        %v844 = vsel %vm767, %v842, %v843
        %v845 = vrot.slane %v309, 5
        %v846 = vrot.slane %v845, 4
        %v847 = vrot.slane %v310, 5
        %v848 = vsel %vm767, %v846, %v847
        %v849 = vrot.slane %v847, 4
        %v850 = vrot.slane %v311, 5
        %v851 = vsel %vm767, %v849, %v850
        %v852 = vrot.slane %v312, 5
        %v853 = vrot.slane %v852, 4
        %v854 = vrot.slane %v313, 5
        %v855 = vsel %vm767, %v853, %v854
        %v856 = vrot.slane %v854, 4
        %v857 = vrot.slane %v314, 5
        %v858 = vsel %vm767, %v856, %v857
        %v859 = vrot.slane %v315, 5
        %v860 = vrot.slane %v859, 4
        %v861 = vrot.slane %v316, 5
        %v862 = vsel %vm767, %v860, %v861
        %v863 = vrot.slane %v861, 4
        %v864 = vrot.slane %v317, 5
        %v865 = vsel %vm767, %v863, %v864
        %v866 = vrot.slane %v318, 5
        %v867 = vrot.slane %v866, 4
        %v868 = vrot.slane %v319, 5
        %v869 = vsel %vm767, %v867, %v868
        %v870 = vrot.slane %v868, 4
        %v871 = vrot.slane %v320, 5
        %v872 = vsel %vm767, %v870, %v871
        %v873 = vrot.slane %v321, 5
        %v874 = vrot.slane %v873, 4
        %v875 = vrot.slane %v322, 5
        %v876 = vsel %vm767, %v874, %v875
        %v877 = vrot.slane %v875, 4
        %v878 = vrot.slane %v323, 5
        %v879 = vsel %vm767, %v877, %v878
        %v880 = vunpack.c.l.b16 %v276
        %v881 = vunpack.c.l.b16 %v277
        %v882 = vunpack.c.l.b16 %v279
        %v883 = vunpack.c.l.b16 %v280
        %v884 = vunpack.c.l.b16 %v282
        %v885 = vunpack.c.l.b16 %v283
        %v886 = vunpack.c.l.b16 %v285
        %v887 = vunpack.c.l.b16 %v286
        %v888 = vunpack.c.l.b16 %v288
        %v889 = vunpack.c.l.b16 %v289
        %v890 = vunpack.c.l.b16 %v291
        %v891 = vunpack.c.l.b16 %v292
        %v892 = vunpack.c.l.b16 %v294
        %v893 = vunpack.c.l.b16 %v295
        %v894 = vunpack.c.l.b16 %v297
        %v895 = vunpack.c.l.b16 %v298
        %v896 = vunpack.c.l.b16 %v300
        %v897 = vunpack.c.l.b16 %v301
        %v898 = vunpack.c.l.b16 %v303
        %v899 = vunpack.c.l.b16 %v304
        %v900 = vunpack.c.l.b16 %v306
        %v901 = vunpack.c.l.b16 %v307
        %v902 = vunpack.c.l.b16 %v309
        %v903 = vunpack.c.l.b16 %v310
        %v904 = vunpack.c.l.b16 %v312
        %v905 = vunpack.c.l.b16 %v313
        %v906 = vunpack.c.l.b16 %v315
        %v907 = vunpack.c.l.b16 %v316
        %v908 = vunpack.c.l.b16 %v318
        %v909 = vunpack.c.l.b16 %v319
        %v910 = vunpack.c.l.b16 %v321
        %v911 = vunpack.c.l.b16 %v322
        %v912 = vpack.c.b16 %v881, %v880
        %v913 = vpack.c.b16 %v883, %v882
        %v914 = vpack.c.b16 %v885, %v884
        %v915 = vpack.c.b16 %v887, %v886
        %v916 = vpack.c.b16 %v889, %v888
        %v917 = vpack.c.b16 %v891, %v890
        %v918 = vpack.c.b16 %v893, %v892
        %v919 = vpack.c.b16 %v895, %v894
        %v920 = vpack.c.b16 %v897, %v896
        %v921 = vpack.c.b16 %v899, %v898
        %v922 = vpack.c.b16 %v901, %v900
        %v923 = vpack.c.b16 %v903, %v902
        %v924 = vpack.c.b16 %v905, %v904
        %v925 = vpack.c.b16 %v907, %v906
        %v926 = vpack.c.b16 %v909, %v908
        %v927 = vpack.c.b16 %v911, %v910
        %v928 = vunpack.c.l.b16 %v346
        %v929 = vunpack.c.l.b16 %v356
        %v930 = vunpack.c.l.b16 %v370
        %v931 = vunpack.c.l.b16 %v380
        %v932 = vunpack.c.l.b16 %v394
        %v933 = vunpack.c.l.b16 %v404
        %v934 = vunpack.c.l.b16 %v418
        %v935 = vunpack.c.l.b16 %v428
        %v936 = vunpack.c.l.b16 %v442
        %v937 = vunpack.c.l.b16 %v452
        %v938 = vunpack.c.l.b16 %v466
        %v939 = vunpack.c.l.b16 %v476
        %v940 = vunpack.c.l.b16 %v490
        %v941 = vunpack.c.l.b16 %v500
        %v942 = vunpack.c.l.b16 %v514
        %v943 = vunpack.c.l.b16 %v524
        %v944 = vunpack.c.l.b16 %v538
        %v945 = vunpack.c.l.b16 %v548
        %v946 = vunpack.c.l.b16 %v562
        %v947 = vunpack.c.l.b16 %v572
        %v948 = vunpack.c.l.b16 %v586
        %v949 = vunpack.c.l.b16 %v596
        %v950 = vunpack.c.l.b16 %v610
        %v951 = vunpack.c.l.b16 %v620
        %v952 = vunpack.c.l.b16 %v634
        %v953 = vunpack.c.l.b16 %v644
        %v954 = vunpack.c.l.b16 %v658
        %v955 = vunpack.c.l.b16 %v668
        %v956 = vunpack.c.l.b16 %v682
        %v957 = vunpack.c.l.b16 %v692
        %v958 = vunpack.c.l.b16 %v706
        %v959 = vunpack.c.l.b16 %v716
        %v960 = vpack.c.b16 %v929, %v928
        %v961 = vpack.c.b16 %v931, %v930
        %v962 = vpack.c.b16 %v933, %v932
        %v963 = vpack.c.b16 %v935, %v934
        %v964 = vpack.c.b16 %v937, %v936
        %v965 = vpack.c.b16 %v939, %v938
        %v966 = vpack.c.b16 %v941, %v940
        %v967 = vpack.c.b16 %v943, %v942
        %v968 = vpack.c.b16 %v945, %v944
        %v969 = vpack.c.b16 %v947, %v946
        %v970 = vpack.c.b16 %v949, %v948
        %v971 = vpack.c.b16 %v951, %v950
        %v972 = vpack.c.b16 %v953, %v952
        %v973 = vpack.c.b16 %v955, %v954
        %v974 = vpack.c.b16 %v957, %v956
        %v975 = vpack.c.b16 %v959, %v958
        %976 = vrot.lane.b32.xlu0 %v960, 4
        %v977 = vpop.permute.xlu0 %976
        %978 = vrot.lane.b32.xlu0 %v961, 4
        %v979 = vpop.permute.xlu0 %978
        %980 = vrot.lane.b32.xlu0 %v962, 4
        %v981 = vpop.permute.xlu0 %980
        %982 = vrot.lane.b32.xlu0 %v963, 4
        %v983 = vpop.permute.xlu0 %982
        %984 = vrot.lane.b32.xlu0 %v964, 4
        %v985 = vpop.permute.xlu0 %984
        %986 = vrot.lane.b32.xlu0 %v965, 4
        %v987 = vpop.permute.xlu0 %986
        %988 = vrot.lane.b32.xlu0 %v966, 4
        %v989 = vpop.permute.xlu0 %988
        %990 = vrot.lane.b32.xlu0 %v967, 4
        %v991 = vpop.permute.xlu0 %990
        %992 = vrot.lane.b32.xlu0 %v968, 4
        %v993 = vpop.permute.xlu0 %992
        %994 = vrot.lane.b32.xlu0 %v969, 4
        %v995 = vpop.permute.xlu0 %994
        %996 = vrot.lane.b32.xlu0 %v970, 4
        %v997 = vpop.permute.xlu0 %996
        %998 = vrot.lane.b32.xlu0 %v971, 4
        %v999 = vpop.permute.xlu0 %998
        %1000 = vrot.lane.b32.xlu0 %v972, 4
        %v1001 = vpop.permute.xlu0 %1000
        %1002 = vrot.lane.b32.xlu0 %v973, 4
        %v1003 = vpop.permute.xlu0 %1002
        %1004 = vrot.lane.b32.xlu0 %v974, 4
        %v1005 = vpop.permute.xlu0 %1004
        %1006 = vrot.lane.b32.xlu0 %v975, 4
        %v1007 = vpop.permute.xlu0 %1006
        %v1008 = vunpack.c.l.b16 %v771
        %v1009 = vunpack.c.l.b16 %v774
        %v1010 = vunpack.c.l.b16 %v778
        %v1011 = vunpack.c.l.b16 %v781
        %v1012 = vunpack.c.l.b16 %v785
        %v1013 = vunpack.c.l.b16 %v788
        %v1014 = vunpack.c.l.b16 %v792
        %v1015 = vunpack.c.l.b16 %v795
        %v1016 = vunpack.c.l.b16 %v799
        %v1017 = vunpack.c.l.b16 %v802
        %v1018 = vunpack.c.l.b16 %v806
        %v1019 = vunpack.c.l.b16 %v809
        %v1020 = vunpack.c.l.b16 %v813
        %v1021 = vunpack.c.l.b16 %v816
        %v1022 = vunpack.c.l.b16 %v820
        %v1023 = vunpack.c.l.b16 %v823
        %v1024 = vunpack.c.l.b16 %v827
        %v1025 = vunpack.c.l.b16 %v830
        %v1026 = vunpack.c.l.b16 %v834
        %v1027 = vunpack.c.l.b16 %v837
        %v1028 = vunpack.c.l.b16 %v841
        %v1029 = vunpack.c.l.b16 %v844
        %v1030 = vunpack.c.l.b16 %v848
        %v1031 = vunpack.c.l.b16 %v851
        %v1032 = vunpack.c.l.b16 %v855
        %v1033 = vunpack.c.l.b16 %v858
        %v1034 = vunpack.c.l.b16 %v862
        %v1035 = vunpack.c.l.b16 %v865
        %v1036 = vunpack.c.l.b16 %v869
        %v1037 = vunpack.c.l.b16 %v872
        %v1038 = vunpack.c.l.b16 %v876
        %v1039 = vunpack.c.l.b16 %v879
        %v1040 = vpack.c.b16 %v1009, %v1008
        %v1041 = vpack.c.b16 %v1011, %v1010
        %v1042 = vpack.c.b16 %v1013, %v1012
        %v1043 = vpack.c.b16 %v1015, %v1014
        %v1044 = vpack.c.b16 %v1017, %v1016
        %v1045 = vpack.c.b16 %v1019, %v1018
        %v1046 = vpack.c.b16 %v1021, %v1020
        %v1047 = vpack.c.b16 %v1023, %v1022
        %v1048 = vpack.c.b16 %v1025, %v1024
        %v1049 = vpack.c.b16 %v1027, %v1026
        %v1050 = vpack.c.b16 %v1029, %v1028
        %v1051 = vpack.c.b16 %v1031, %v1030
        %v1052 = vpack.c.b16 %v1033, %v1032
        %v1053 = vpack.c.b16 %v1035, %v1034
        %v1054 = vpack.c.b16 %v1037, %v1036
        %v1055 = vpack.c.b16 %v1039, %v1038
        %1056 = vrot.lane.b32.xlu0 %v1040, 8
        %v1057 = vpop.permute.xlu0 %1056
        %1058 = vrot.lane.b32.xlu0 %v1041, 8
        %v1059 = vpop.permute.xlu0 %1058
        %1060 = vrot.lane.b32.xlu0 %v1042, 8
        %v1061 = vpop.permute.xlu0 %1060
        %1062 = vrot.lane.b32.xlu0 %v1043, 8
        %v1063 = vpop.permute.xlu0 %1062
        %1064 = vrot.lane.b32.xlu0 %v1044, 8
        %v1065 = vpop.permute.xlu0 %1064
        %1066 = vrot.lane.b32.xlu0 %v1045, 8
        %v1067 = vpop.permute.xlu0 %1066
        %1068 = vrot.lane.b32.xlu0 %v1046, 8
        %v1069 = vpop.permute.xlu0 %1068
        %1070 = vrot.lane.b32.xlu0 %v1047, 8
        %v1071 = vpop.permute.xlu0 %1070
        %1072 = vrot.lane.b32.xlu0 %v1048, 8
        %v1073 = vpop.permute.xlu0 %1072
        %1074 = vrot.lane.b32.xlu0 %v1049, 8
        %v1075 = vpop.permute.xlu0 %1074
        %1076 = vrot.lane.b32.xlu0 %v1050, 8
        %v1077 = vpop.permute.xlu0 %1076
        %1078 = vrot.lane.b32.xlu0 %v1051, 8
        %v1079 = vpop.permute.xlu0 %1078
        %1080 = vrot.lane.b32.xlu0 %v1052, 8
        %v1081 = vpop.permute.xlu0 %1080
        %1082 = vrot.lane.b32.xlu0 %v1053, 8
        %v1083 = vpop.permute.xlu0 %1082
        %1084 = vrot.lane.b32.xlu0 %v1054, 8
        %v1085 = vpop.permute.xlu0 %1084
        %1086 = vrot.lane.b32.xlu0 %v1055, 8
        %v1087 = vpop.permute.xlu0 %1086
        %vm1088 = vcmask 31744
        %v1091 = vsel %vm1088, %v912, %v977
        %v1094 = vsel %vm1088, %v913, %v979
        %v1097 = vsel %vm1088, %v914, %v981
        %v1100 = vsel %vm1088, %v915, %v983
        %v1103 = vsel %vm1088, %v916, %v985
        %v1106 = vsel %vm1088, %v917, %v987
        %v1109 = vsel %vm1088, %v918, %v989
        %v1112 = vsel %vm1088, %v919, %v991
        %v1115 = vsel %vm1088, %v920, %v993
        %v1118 = vsel %vm1088, %v921, %v995
        %v1121 = vsel %vm1088, %v922, %v997
        %v1124 = vsel %vm1088, %v923, %v999
        %v1127 = vsel %vm1088, %v924, %v1001
        %v1130 = vsel %vm1088, %v925, %v1003
        %v1133 = vsel %vm1088, %v926, %v1005
        %v1136 = vsel %vm1088, %v927, %v1007
        %vm1137 = vcmask 64512
        %v1139 = vsel %vm1137, %v1091, %v1057
        %v1141 = vsel %vm1137, %v1094, %v1059
        %v1143 = vsel %vm1137, %v1097, %v1061
        %v1145 = vsel %vm1137, %v1100, %v1063
        %v1147 = vsel %vm1137, %v1103, %v1065
        %v1149 = vsel %vm1137, %v1106, %v1067
        %v1151 = vsel %vm1137, %v1109, %v1069
        %v1153 = vsel %vm1137, %v1112, %v1071
        %v1155 = vsel %vm1137, %v1115, %v1073
        %v1157 = vsel %vm1137, %v1118, %v1075
        %v1159 = vsel %vm1137, %v1121, %v1077
        %v1161 = vsel %vm1137, %v1124, %v1079
        %v1163 = vsel %vm1137, %v1127, %v1081
        %v1165 = vsel %vm1137, %v1130, %v1083
        %v1167 = vsel %vm1137, %v1133, %v1085
        %v1169 = vsel %vm1137, %v1136, %v1087
        %v1170 = vld [vmem:[#allocation6] sm:$0xf]
        %v1171 = vld [vmem:[#allocation6 + $0x4] sm:$0x3]
        %v1174 = vunpack.c.l.b16 %v1170
        %v1175 = vunpack.c.l.b16 %v1171
        %v1176 = vpack.c.b16 %v1175, %v1174
        %vm1177 = vcmask 97280
        %v1178 = vsel %vm1177, %v1139, 0
        %v1180 = vsel %vm1177, %v1141, 0
        %v1182 = vsel %vm1177, %v1143, 0
        %v1184 = vsel %vm1177, %v1145, 0
        %v1186 = vsel %vm1177, %v1147, 0
        %v1188 = vsel %vm1177, %v1149, 0
        %v1190 = vsel %vm1177, %v1151, 0
        %v1192 = vsel %vm1177, %v1153, 0
        %v1194 = vsel %vm1177, %v1155, 0
        %v1196 = vsel %vm1177, %v1157, 0
        %v1198 = vsel %vm1177, %v1159, 0
        %v1200 = vsel %vm1177, %v1161, 0
        %v1202 = vsel %vm1177, %v1163, 0
        %v1204 = vsel %vm1177, %v1165, 0
        %v1206 = vsel %vm1177, %v1167, 0
        %v1208 = vsel %vm1177, %v1169, 0
        %vm1210 = vcmask 1045504
        %v1212 = vsel %vm1210, %v1176, 0
        %1214 = vmatprep.subr.bf16.mxu0 0
        %1215 = vmatpush1.bf16.msra.mxu0 %v1212
        %1216 = vmatprep.subr.bf16.mxu0 0
        %1217 = vmatpush1.bf16.msra.mxu0 0
        %1218 = vmatprep.subr.bf16.mxu0 0
        %1219 = vmatpush1.bf16.msra.mxu0 0
        %1220 = vmatprep.subr.bf16.mxu0 0
        %1221 = vmatpush1.bf16.msra.mxu0 0
        %1222 = vmatprep.subr.bf16.mxu0 0
        %1223 = vmatpush1.bf16.msra.mxu0 0
        %1224 = vmatprep.subr.bf16.mxu0 0
        %1225 = vmatpush1.bf16.msra.mxu0 0
        %1226 = vmatprep.subr.bf16.mxu0 0
        %1227 = vmatpush1.bf16.msra.mxu0 0
        %1228 = vmatprep.subr.bf16.mxu0 0
        %1229 = vmatpush1.bf16.msra.mxu0 0
        %1230 = vmatprep.subr.bf16.mxu0 0
        %1231 = vmatpush1.bf16.msra.mxu0 0
        %1232 = vmatprep.subr.bf16.mxu0 0
        %1233 = vmatpush1.bf16.msra.mxu0 0
        %1234 = vmatprep.subr.bf16.mxu0 0
        %1235 = vmatpush1.bf16.msra.mxu0 0
        %1236 = vmatprep.subr.bf16.mxu0 0
        %1237 = vmatpush1.bf16.msra.mxu0 0
        %1238 = vmatprep.subr.bf16.mxu0 0
        %1239 = vmatpush1.bf16.msra.mxu0 0
        %1240 = vmatprep.subr.bf16.mxu0 0
        %1241 = vmatpush1.bf16.msra.mxu0 0
        %1242 = vmatprep.subr.bf16.mxu0 0
        %1243 = vmatpush1.bf16.msra.mxu0 0
        %1244 = vmatprep.subr.bf16.mxu0 0
        %1245 = vmatpush1.bf16.msra.mxu0 0
        %1246 = vmatprep.mubr.bf16.mxu0 0
        %1247 = vmatmul.mubr.bf16.gmra.mrb[0].mxu0 %v1178
        %v1248 = vpop.f32.mrb[0].mxu0
        %v1249 = vadd.f32 0.0, %v1248
        %v1250 = vpop.f32.mrb[0].mxu0
        %v1251 = vpop.f32.mrb[0].mxu0
        %v1252 = vadd.f32 0.0, %v1251
        %v1253 = vpop.f32.mrb[0].mxu0
        %1254 = vmatprep.mubr.bf16.mxu0 0
        %1255 = vmatmul.mubr.bf16.gmra.mrb[0].mxu0 %v1180
        %v1256 = vpop.f32.mrb[0].mxu0
        %v1257 = vadd.f32 0.0, %v1256
        %v1258 = vpop.f32.mrb[0].mxu0
        %v1259 = vpop.f32.mrb[0].mxu0
        %v1260 = vadd.f32 0.0, %v1259
        %v1261 = vpop.f32.mrb[0].mxu0
        %1262 = vmatprep.mubr.bf16.mxu0 0
        %1263 = vmatmul.mubr.bf16.gmra.mrb[0].mxu0 %v1182
        %v1264 = vpop.f32.mrb[0].mxu0
        %v1265 = vadd.f32 0.0, %v1264
        %v1266 = vpop.f32.mrb[0].mxu0
        %v1267 = vpop.f32.mrb[0].mxu0
        %v1268 = vadd.f32 0.0, %v1267
        %v1269 = vpop.f32.mrb[0].mxu0
        %1270 = vmatprep.mubr.bf16.mxu0 0
        %1271 = vmatmul.mubr.bf16.gmra.mrb[0].mxu0 %v1184
        %v1272 = vpop.f32.mrb[0].mxu0
        %v1273 = vadd.f32 0.0, %v1272
        %v1274 = vpop.f32.mrb[0].mxu0
        %v1275 = vpop.f32.mrb[0].mxu0
        %v1276 = vadd.f32 0.0, %v1275
        %v1277 = vpop.f32.mrb[0].mxu0
        %1278 = vmatprep.mubr.bf16.mxu0 0
        %1279 = vmatmul.mubr.bf16.gmra.mrb[0].mxu0 %v1186
        %v1280 = vpop.f32.mrb[0].mxu0
        %v1281 = vadd.f32 0.0, %v1280
        %v1282 = vpop.f32.mrb[0].mxu0
        %v1283 = vpop.f32.mrb[0].mxu0
        %v1284 = vadd.f32 0.0, %v1283
        %v1285 = vpop.f32.mrb[0].mxu0
        %1286 = vmatprep.mubr.bf16.mxu0 0
        %1287 = vmatmul.mubr.bf16.gmra.mrb[0].mxu0 %v1188
        %v1288 = vpop.f32.mrb[0].mxu0
        %v1289 = vadd.f32 0.0, %v1288
        %v1290 = vpop.f32.mrb[0].mxu0
        %v1291 = vpop.f32.mrb[0].mxu0
        %v1292 = vadd.f32 0.0, %v1291
        %v1293 = vpop.f32.mrb[0].mxu0
        %1294 = vmatprep.mubr.bf16.mxu0 0
        %1295 = vmatmul.mubr.bf16.gmra.mrb[0].mxu0 %v1190
        %v1296 = vpop.f32.mrb[0].mxu0
        %v1297 = vadd.f32 0.0, %v1296
        %v1298 = vpop.f32.mrb[0].mxu0
        %v1299 = vpop.f32.mrb[0].mxu0
        %v1300 = vadd.f32 0.0, %v1299
        %v1301 = vpop.f32.mrb[0].mxu0
        %1302 = vmatprep.mubr.bf16.mxu0 0
        %1303 = vmatmul.mubr.bf16.gmra.mrb[0].mxu0 %v1192
        %v1304 = vpop.f32.mrb[0].mxu0
        %v1305 = vadd.f32 0.0, %v1304
        %v1306 = vpop.f32.mrb[0].mxu0
        %v1307 = vpop.f32.mrb[0].mxu0
        %v1308 = vadd.f32 0.0, %v1307
        %v1309 = vpop.f32.mrb[0].mxu0
        %1310 = vmatprep.mubr.bf16.mxu0 0
        %1311 = vmatmul.mubr.bf16.gmra.mrb[0].mxu0 %v1194
        %v1312 = vpop.f32.mrb[0].mxu0
        %v1313 = vadd.f32 0.0, %v1312
        %v1314 = vpop.f32.mrb[0].mxu0
        %v1315 = vpop.f32.mrb[0].mxu0
        %v1316 = vadd.f32 0.0, %v1315
        %v1317 = vpop.f32.mrb[0].mxu0
        %1318 = vmatprep.mubr.bf16.mxu0 0
        %1319 = vmatmul.mubr.bf16.gmra.mrb[0].mxu0 %v1196
        %v1320 = vpop.f32.mrb[0].mxu0
        %v1321 = vadd.f32 0.0, %v1320
        %v1322 = vpop.f32.mrb[0].mxu0
        %v1323 = vpop.f32.mrb[0].mxu0
        %v1324 = vadd.f32 0.0, %v1323
        %v1325 = vpop.f32.mrb[0].mxu0
        %1326 = vmatprep.mubr.bf16.mxu0 0
        %1327 = vmatmul.mubr.bf16.gmra.mrb[0].mxu0 %v1198
        %v1328 = vpop.f32.mrb[0].mxu0
        %v1329 = vadd.f32 0.0, %v1328
        %v1330 = vpop.f32.mrb[0].mxu0
        %v1331 = vpop.f32.mrb[0].mxu0
        %v1332 = vadd.f32 0.0, %v1331
        %v1333 = vpop.f32.mrb[0].mxu0
        %1334 = vmatprep.mubr.bf16.mxu0 0
        %1335 = vmatmul.mubr.bf16.gmra.mrb[0].mxu0 %v1200
        %v1336 = vpop.f32.mrb[0].mxu0
        %v1337 = vadd.f32 0.0, %v1336
        %v1338 = vpop.f32.mrb[0].mxu0
        %v1339 = vpop.f32.mrb[0].mxu0
        %v1340 = vadd.f32 0.0, %v1339
        %v1341 = vpop.f32.mrb[0].mxu0
        %1342 = vmatprep.mubr.bf16.mxu0 0
        %1343 = vmatmul.mubr.bf16.gmra.mrb[0].mxu0 %v1202
        %v1344 = vpop.f32.mrb[0].mxu0
        %v1345 = vadd.f32 0.0, %v1344
        %v1346 = vpop.f32.mrb[0].mxu0
        %v1347 = vpop.f32.mrb[0].mxu0
        %v1348 = vadd.f32 0.0, %v1347
        %v1349 = vpop.f32.mrb[0].mxu0
        %1350 = vmatprep.mubr.bf16.mxu0 0
        %1351 = vmatmul.mubr.bf16.gmra.mrb[0].mxu0 %v1204
        %v1352 = vpop.f32.mrb[0].mxu0
        %v1353 = vadd.f32 0.0, %v1352
        %v1354 = vpop.f32.mrb[0].mxu0
        %v1355 = vpop.f32.mrb[0].mxu0
        %v1356 = vadd.f32 0.0, %v1355
        %v1357 = vpop.f32.mrb[0].mxu0
        %1358 = vmatprep.mubr.bf16.mxu0 0
        %1359 = vmatmul.mubr.bf16.gmra.mrb[0].mxu0 %v1206
        %v1360 = vpop.f32.mrb[0].mxu0
        %v1361 = vadd.f32 0.0, %v1360
        %v1362 = vpop.f32.mrb[0].mxu0
        %v1363 = vpop.f32.mrb[0].mxu0
        %v1364 = vadd.f32 0.0, %v1363
        %v1365 = vpop.f32.mrb[0].mxu0
        %1366 = vmatprep.mubr.bf16.mxu0 0
        %1367 = vmatmul.mubr.bf16.gmra.mrb[0].mxu0 %v1208
        %v1368 = vpop.f32.mrb[0].mxu0
        %v1369 = vadd.f32 0.0, %v1368
        %v1370 = vpop.f32.mrb[0].mxu0
        %v1371 = vpop.f32.mrb[0].mxu0
        %v1372 = vadd.f32 0.0, %v1371
        %v1373 = vpop.f32.mrb[0].mxu0
        %1374 = vdwg.mxu0
        %vm1375 = vcmask 130048
        %1376 = vst.msk [vmem:[#allocation2] sm:$0xff] %vm1375, %v1249
        %1377 = vst.msk [vmem:[#allocation2 + $0x8] sm:$0xff] %vm1375, %v1252
        %1378 = vst.msk [vmem:[#allocation2 + $0x10] sm:$0xff] %vm1375, %v1257
        %1379 = vst.msk [vmem:[#allocation2 + $0x18] sm:$0xff] %vm1375, %v1260
        %1380 = vst.msk [vmem:[#allocation2 + $0x20] sm:$0xff] %vm1375, %v1265
        %1381 = vst.msk [vmem:[#allocation2 + $0x28] sm:$0xff] %vm1375, %v1268
        %1382 = vst.msk [vmem:[#allocation2 + $0x30] sm:$0xff] %vm1375, %v1273
        %1383 = vst.msk [vmem:[#allocation2 + $0x38] sm:$0xff] %vm1375, %v1276
        %1384 = vst.msk [vmem:[#allocation2 + $0x40] sm:$0xff] %vm1375, %v1281
        %1385 = vst.msk [vmem:[#allocation2 + $0x48] sm:$0xff] %vm1375, %v1284
        %1386 = vst.msk [vmem:[#allocation2 + $0x50] sm:$0xff] %vm1375, %v1289
        %1387 = vst.msk [vmem:[#allocation2 + $0x58] sm:$0xff] %vm1375, %v1292
        %1388 = vst.msk [vmem:[#allocation2 + $0x60] sm:$0xff] %vm1375, %v1297
        %1389 = vst.msk [vmem:[#allocation2 + $0x68] sm:$0xff] %vm1375, %v1300
        %1390 = vst.msk [vmem:[#allocation2 + $0x70] sm:$0xff] %vm1375, %v1305
        %1391 = vst.msk [vmem:[#allocation2 + $0x78] sm:$0xff] %vm1375, %v1308
        %1392 = vst.msk [vmem:[#allocation2 + $0x80] sm:$0xff] %vm1375, %v1313
        %1393 = vst.msk [vmem:[#allocation2 + $0x88] sm:$0xff] %vm1375, %v1316
        %1394 = vst.msk [vmem:[#allocation2 + $0x90] sm:$0xff] %vm1375, %v1321
        %1395 = vst.msk [vmem:[#allocation2 + $0x98] sm:$0xff] %vm1375, %v1324
        %1396 = vst.msk [vmem:[#allocation2 + $0xa0] sm:$0xff] %vm1375, %v1329
        %1397 = vst.msk [vmem:[#allocation2 + $0xa8] sm:$0xff] %vm1375, %v1332
        %1398 = vst.msk [vmem:[#allocation2 + $0xb0] sm:$0xff] %vm1375, %v1337
        %1399 = vst.msk [vmem:[#allocation2 + $0xb8] sm:$0xff] %vm1375, %v1340
        %1400 = vst.msk [vmem:[#allocation2 + $0xc0] sm:$0xff] %vm1375, %v1345
        %1401 = vst.msk [vmem:[#allocation2 + $0xc8] sm:$0xff] %vm1375, %v1348
        %1402 = vst.msk [vmem:[#allocation2 + $0xd0] sm:$0xff] %vm1375, %v1353
        %1403 = vst.msk [vmem:[#allocation2 + $0xd8] sm:$0xff] %vm1375, %v1356
        %1404 = vst.msk [vmem:[#allocation2 + $0xe0] sm:$0xff] %vm1375, %v1361
        %1405 = vst.msk [vmem:[#allocation2 + $0xe8] sm:$0xff] %vm1375, %v1364
        %1406 = vst.msk [vmem:[#allocation2 + $0xf0] sm:$0xff] %vm1375, %v1369
        %1407 = vst.msk [vmem:[#allocation2 + $0xf8] sm:$0xff] %vm1375, %v1372
        %v1408 = vld [vmem:[#allocation2] sm:$0xff]
        %v1409 = vld [vmem:[#allocation2 + $0x8] sm:$0xff]
        %v1410 = vld [vmem:[#allocation2 + $0x10] sm:$0xff]
        %v1411 = vld [vmem:[#allocation2 + $0x18] sm:$0xff]
        %v1412 = vld [vmem:[#allocation2 + $0x20] sm:$0xff]
        %v1413 = vld [vmem:[#allocation2 + $0x28] sm:$0xff]
        %v1414 = vld [vmem:[#allocation2 + $0x30] sm:$0xff]
        %v1415 = vld [vmem:[#allocation2 + $0x38] sm:$0xff]
        %v1416 = vld [vmem:[#allocation2 + $0x40] sm:$0xff]
        %v1417 = vld [vmem:[#allocation2 + $0x48] sm:$0xff]
        %v1418 = vld [vmem:[#allocation2 + $0x50] sm:$0xff]
        %v1419 = vld [vmem:[#allocation2 + $0x58] sm:$0xff]
        %v1420 = vld [vmem:[#allocation2 + $0x60] sm:$0xff]
        %v1421 = vld [vmem:[#allocation2 + $0x68] sm:$0xff]
        %v1422 = vld [vmem:[#allocation2 + $0x70] sm:$0xff]
        %v1423 = vld [vmem:[#allocation2 + $0x78] sm:$0xff]
        %v1424 = vld [vmem:[#allocation2 + $0x80] sm:$0xff]
        %v1425 = vld [vmem:[#allocation2 + $0x88] sm:$0xff]
        %v1426 = vld [vmem:[#allocation2 + $0x90] sm:$0xff]
        %v1427 = vld [vmem:[#allocation2 + $0x98] sm:$0xff]
        %v1428 = vld [vmem:[#allocation2 + $0xa0] sm:$0xff]
        %v1429 = vld [vmem:[#allocation2 + $0xa8] sm:$0xff]
        %v1430 = vld [vmem:[#allocation2 + $0xb0] sm:$0xff]
        %v1431 = vld [vmem:[#allocation2 + $0xb8] sm:$0xff]
        %v1432 = vld [vmem:[#allocation2 + $0xc0] sm:$0xff]
        %v1433 = vld [vmem:[#allocation2 + $0xc8] sm:$0xff]
        %v1434 = vld [vmem:[#allocation2 + $0xd0] sm:$0xff]
        %v1435 = vld [vmem:[#allocation2 + $0xd8] sm:$0xff]
        %v1436 = vld [vmem:[#allocation2 + $0xe0] sm:$0xff]
        %v1437 = vld [vmem:[#allocation2 + $0xe8] sm:$0xff]
        %v1438 = vld [vmem:[#allocation2 + $0xf0] sm:$0xff]
        %v1439 = vld [vmem:[#allocation2 + $0xf8] sm:$0xff]
        %v1441 = vshrl.u32 %v324, 16
        %v1443 = vrot.slane %v1441, 4
        %v1444 = vshll.u32 %v324, 16
        %v1446 = vrot.slane %v1444, 5
        %v1447 = vor.u32 %v1443, %v1446
        %v1448 = vrot.slane %v1447, 4
        %v1450 = vshll.u32 %v325, 16
        %v1452 = vrot.slane %v1450, 5
        %v1453 = vsel %vm332, %v1448, %v1452
        %v1454 = vshrl.u32 %v325, 16
        %v1456 = vrot.slane %v1454, 4
        %v1457 = vor.u32 %v1456, %v1452
        %v1458 = vrot.slane %v1457, 4
        %v1460 = vshll.u32 %v326, 16
        %v1462 = vrot.slane %v1460, 5
        %v1463 = vsel %vm332, %v1458, %v1462
        %v1467 = vrot.slane %v324, 5
        %v1468 = vrot.slane %v1467, 4
        %v1469 = vrot.slane %v325, 5
        %v1470 = vsel %vm767, %v1468, %v1469
        %v1471 = vrot.slane %v1469, 4
        %v1472 = vrot.slane %v326, 5
        %v1473 = vsel %vm767, %v1471, %v1472
        %v1474 = vunpack.c.l.b16 %v324
        %v1475 = vunpack.c.l.b16 %v325
        %v1476 = vpack.c.b16 %v1475, %v1474
        %v1477 = vunpack.c.l.b16 %v1453
        %v1478 = vunpack.c.l.b16 %v1463
        %v1479 = vpack.c.b16 %v1478, %v1477
        %1480 = vrot.lane.b32.xlu0 %v1479, 4
        %v1481 = vpop.permute.xlu0 %1480
        %v1482 = vunpack.c.l.b16 %v1470
        %v1483 = vunpack.c.l.b16 %v1473
        %v1484 = vpack.c.b16 %v1483, %v1482
        %1485 = vrot.lane.b32.xlu0 %v1484, 8
        %v1486 = vpop.permute.xlu0 %1485
        %v1489 = vsel %vm1088, %v1476, %v1481
        %v1491 = vsel %vm1137, %v1489, %v1486
        %v1492 = vld [vmem:[#allocation6 + $0x4] sm:$0xc]
        %v1493 = vld [vmem:[#allocation6 + $0x8] sm:$0xf]
        %v1496 = vunpack.c.l.b16 %v1492
        %v1497 = vunpack.c.l.b16 %v1493
        %v1498 = vpack.c.b16 %v1497, %v1496
        %v1499 = vrot.slane %v1498, 2
        %v1500 = vsel %vm1177, %v1491, 0
        %v1503 = vsel %vm1210, %v1499, 0
        %1505 = vmatprep.subr.bf16.mxu0 0
        %1506 = vmatpush1.bf16.msra.mxu0 %v1503
        %1507 = vmatprep.subr.bf16.mxu0 0
        %1508 = vmatpush1.bf16.msra.mxu0 0
        %1509 = vmatprep.subr.bf16.mxu0 0
        %1510 = vmatpush1.bf16.msra.mxu0 0
        %1511 = vmatprep.subr.bf16.mxu0 0
        %1512 = vmatpush1.bf16.msra.mxu0 0
        %1513 = vmatprep.subr.bf16.mxu0 0
        %1514 = vmatpush1.bf16.msra.mxu0 0
        %1515 = vmatprep.subr.bf16.mxu0 0
        %1516 = vmatpush1.bf16.msra.mxu0 0
        %1517 = vmatprep.subr.bf16.mxu0 0
        %1518 = vmatpush1.bf16.msra.mxu0 0
        %1519 = vmatprep.subr.bf16.mxu0 0
        %1520 = vmatpush1.bf16.msra.mxu0 0
        %1521 = vmatprep.subr.bf16.mxu0 0
        %1522 = vmatpush1.bf16.msra.mxu0 0
        %1523 = vmatprep.subr.bf16.mxu0 0
        %1524 = vmatpush1.bf16.msra.mxu0 0
        %1525 = vmatprep.subr.bf16.mxu0 0
        %1526 = vmatpush1.bf16.msra.mxu0 0
        %1527 = vmatprep.subr.bf16.mxu0 0
        %1528 = vmatpush1.bf16.msra.mxu0 0
        %1529 = vmatprep.subr.bf16.mxu0 0
        %1530 = vmatpush1.bf16.msra.mxu0 0
        %1531 = vmatprep.subr.bf16.mxu0 0
        %1532 = vmatpush1.bf16.msra.mxu0 0
        %1533 = vmatprep.subr.bf16.mxu0 0
        %1534 = vmatpush1.bf16.msra.mxu0 0
        %1535 = vmatprep.subr.bf16.mxu0 0
        %1536 = vmatpush1.bf16.msra.mxu0 0
        %1537 = vmatprep.mubr.bf16.mxu0 0
        %1538 = vmatmul.mubr.bf16.gmra.mrb[0].mxu0 %v1180
        %v1539 = vpop.f32.mrb[0].mxu0
        %v1540 = vadd.f32 0.0, %v1539
        %v1541 = vpop.f32.mrb[0].mxu0
        %v1542 = vpop.f32.mrb[0].mxu0
        %v1543 = vadd.f32 0.0, %v1542
        %v1544 = vpop.f32.mrb[0].mxu0
        %1545 = vmatprep.mubr.bf16.mxu0 0
        %1546 = vmatmul.mubr.bf16.gmra.mrb[0].mxu0 %v1182
        %v1547 = vpop.f32.mrb[0].mxu0
        %v1548 = vadd.f32 0.0, %v1547
        %v1549 = vpop.f32.mrb[0].mxu0
        %v1550 = vpop.f32.mrb[0].mxu0
        %v1551 = vadd.f32 0.0, %v1550
        %v1552 = vpop.f32.mrb[0].mxu0
        %1553 = vmatprep.mubr.bf16.mxu0 0
        %1554 = vmatmul.mubr.bf16.gmra.mrb[0].mxu0 %v1184
        %v1555 = vpop.f32.mrb[0].mxu0
        %v1556 = vadd.f32 0.0, %v1555
        %v1557 = vpop.f32.mrb[0].mxu0
        %v1558 = vpop.f32.mrb[0].mxu0
        %v1559 = vadd.f32 0.0, %v1558
        %v1560 = vpop.f32.mrb[0].mxu0
        %1561 = vmatprep.mubr.bf16.mxu0 0
        %1562 = vmatmul.mubr.bf16.gmra.mrb[0].mxu0 %v1186
        %v1563 = vpop.f32.mrb[0].mxu0
        %v1564 = vadd.f32 0.0, %v1563
        %v1565 = vpop.f32.mrb[0].mxu0
        %v1566 = vpop.f32.mrb[0].mxu0
        %v1567 = vadd.f32 0.0, %v1566
        %v1568 = vpop.f32.mrb[0].mxu0
        %1569 = vmatprep.mubr.bf16.mxu0 0
        %1570 = vmatmul.mubr.bf16.gmra.mrb[0].mxu0 %v1188
        %v1571 = vpop.f32.mrb[0].mxu0
        %v1572 = vadd.f32 0.0, %v1571
        %v1573 = vpop.f32.mrb[0].mxu0
        %v1574 = vpop.f32.mrb[0].mxu0
        %v1575 = vadd.f32 0.0, %v1574
        %v1576 = vpop.f32.mrb[0].mxu0
        %1577 = vmatprep.mubr.bf16.mxu0 0
        %1578 = vmatmul.mubr.bf16.gmra.mrb[0].mxu0 %v1190
        %v1579 = vpop.f32.mrb[0].mxu0
        %v1580 = vadd.f32 0.0, %v1579
        %v1581 = vpop.f32.mrb[0].mxu0
        %v1582 = vpop.f32.mrb[0].mxu0
        %v1583 = vadd.f32 0.0, %v1582
        %v1584 = vpop.f32.mrb[0].mxu0
        %1585 = vmatprep.mubr.bf16.mxu0 0
        %1586 = vmatmul.mubr.bf16.gmra.mrb[0].mxu0 %v1192
        %v1587 = vpop.f32.mrb[0].mxu0
        %v1588 = vadd.f32 0.0, %v1587
        %v1589 = vpop.f32.mrb[0].mxu0
        %v1590 = vpop.f32.mrb[0].mxu0
        %v1591 = vadd.f32 0.0, %v1590
        %v1592 = vpop.f32.mrb[0].mxu0
        %1593 = vmatprep.mubr.bf16.mxu0 0
        %1594 = vmatmul.mubr.bf16.gmra.mrb[0].mxu0 %v1194
        %v1595 = vpop.f32.mrb[0].mxu0
        %v1596 = vadd.f32 0.0, %v1595
        %v1597 = vpop.f32.mrb[0].mxu0
        %v1598 = vpop.f32.mrb[0].mxu0
        %v1599 = vadd.f32 0.0, %v1598
        %v1600 = vpop.f32.mrb[0].mxu0
        %1601 = vmatprep.mubr.bf16.mxu0 0
        %1602 = vmatmul.mubr.bf16.gmra.mrb[0].mxu0 %v1196
        %v1603 = vpop.f32.mrb[0].mxu0
        %v1604 = vadd.f32 0.0, %v1603
        %v1605 = vpop.f32.mrb[0].mxu0
        %v1606 = vpop.f32.mrb[0].mxu0
        %v1607 = vadd.f32 0.0, %v1606
        %v1608 = vpop.f32.mrb[0].mxu0
        %1609 = vmatprep.mubr.bf16.mxu0 0
        %1610 = vmatmul.mubr.bf16.gmra.mrb[0].mxu0 %v1198
        %v1611 = vpop.f32.mrb[0].mxu0
        %v1612 = vadd.f32 0.0, %v1611
        %v1613 = vpop.f32.mrb[0].mxu0
        %v1614 = vpop.f32.mrb[0].mxu0
        %v1615 = vadd.f32 0.0, %v1614
        %v1616 = vpop.f32.mrb[0].mxu0
        %1617 = vmatprep.mubr.bf16.mxu0 0
        %1618 = vmatmul.mubr.bf16.gmra.mrb[0].mxu0 %v1200
        %v1619 = vpop.f32.mrb[0].mxu0
        %v1620 = vadd.f32 0.0, %v1619
        %v1621 = vpop.f32.mrb[0].mxu0
        %v1622 = vpop.f32.mrb[0].mxu0
        %v1623 = vadd.f32 0.0, %v1622
        %v1624 = vpop.f32.mrb[0].mxu0
        %1625 = vmatprep.mubr.bf16.mxu0 0
        %1626 = vmatmul.mubr.bf16.gmra.mrb[0].mxu0 %v1202
        %v1627 = vpop.f32.mrb[0].mxu0
        %v1628 = vadd.f32 0.0, %v1627
        %v1629 = vpop.f32.mrb[0].mxu0
        %v1630 = vpop.f32.mrb[0].mxu0
        %v1631 = vadd.f32 0.0, %v1630
        %v1632 = vpop.f32.mrb[0].mxu0
        %1633 = vmatprep.mubr.bf16.mxu0 0
        %1634 = vmatmul.mubr.bf16.gmra.mrb[0].mxu0 %v1204
        %v1635 = vpop.f32.mrb[0].mxu0
        %v1636 = vadd.f32 0.0, %v1635
        %v1637 = vpop.f32.mrb[0].mxu0
        %v1638 = vpop.f32.mrb[0].mxu0
        %v1639 = vadd.f32 0.0, %v1638
        %v1640 = vpop.f32.mrb[0].mxu0
        %1641 = vmatprep.mubr.bf16.mxu0 0
        %1642 = vmatmul.mubr.bf16.gmra.mrb[0].mxu0 %v1206
        %v1643 = vpop.f32.mrb[0].mxu0
        %v1644 = vadd.f32 0.0, %v1643
        %v1645 = vpop.f32.mrb[0].mxu0
        %v1646 = vpop.f32.mrb[0].mxu0
        %v1647 = vadd.f32 0.0, %v1646
        %v1648 = vpop.f32.mrb[0].mxu0
        %1649 = vmatprep.mubr.bf16.mxu0 0
        %1650 = vmatmul.mubr.bf16.gmra.mrb[0].mxu0 %v1208
        %v1651 = vpop.f32.mrb[0].mxu0
        %v1652 = vadd.f32 0.0, %v1651
        %v1653 = vpop.f32.mrb[0].mxu0
        %v1654 = vpop.f32.mrb[0].mxu0
        %v1655 = vadd.f32 0.0, %v1654
        %v1656 = vpop.f32.mrb[0].mxu0
        %1657 = vmatprep.mubr.bf16.mxu0 0
        %1658 = vmatmul.mubr.bf16.gmra.mrb[0].mxu0 %v1500
        %v1659 = vpop.f32.mrb[0].mxu0
        %v1660 = vadd.f32 0.0, %v1659
        %v1661 = vpop.f32.mrb[0].mxu0
        %v1662 = vpop.f32.mrb[0].mxu0
        %v1663 = vadd.f32 0.0, %v1662
        %v1664 = vpop.f32.mrb[0].mxu0
        %1665 = vdwg.mxu0
        %v1666 = vadd.f32 %v1408, %v1540
        %v1667 = vadd.f32 %v1409, %v1543
        %v1668 = vadd.f32 %v1410, %v1548
        %v1669 = vadd.f32 %v1411, %v1551
        %v1670 = vadd.f32 %v1412, %v1556
        %v1671 = vadd.f32 %v1413, %v1559
        %v1672 = vadd.f32 %v1414, %v1564
        %v1673 = vadd.f32 %v1415, %v1567
        %v1674 = vadd.f32 %v1416, %v1572
        %v1675 = vadd.f32 %v1417, %v1575
        %v1676 = vadd.f32 %v1418, %v1580
        %v1677 = vadd.f32 %v1419, %v1583
        %v1678 = vadd.f32 %v1420, %v1588
        %v1679 = vadd.f32 %v1421, %v1591
        %v1680 = vadd.f32 %v1422, %v1596
        %v1681 = vadd.f32 %v1423, %v1599
        %v1682 = vadd.f32 %v1424, %v1604
        %v1683 = vadd.f32 %v1425, %v1607
        %v1684 = vadd.f32 %v1426, %v1612
        %v1685 = vadd.f32 %v1427, %v1615
        %v1686 = vadd.f32 %v1428, %v1620
        %v1687 = vadd.f32 %v1429, %v1623
        %v1688 = vadd.f32 %v1430, %v1628
        %v1689 = vadd.f32 %v1431, %v1631
        %v1690 = vadd.f32 %v1432, %v1636
        %v1691 = vadd.f32 %v1433, %v1639
        %v1692 = vadd.f32 %v1434, %v1644
        %v1693 = vadd.f32 %v1435, %v1647
        %v1694 = vadd.f32 %v1436, %v1652
        %v1695 = vadd.f32 %v1437, %v1655
        %v1696 = vadd.f32 %v1438, %v1660
        %v1697 = vadd.f32 %v1439, %v1663
        %1698 = vst.msk [vmem:[#allocation2] sm:$0xff] %vm1375, %v1666
        %1699 = vst.msk [vmem:[#allocation2 + $0x8] sm:$0xff] %vm1375, %v1667
        %1700 = vst.msk [vmem:[#allocation2 + $0x10] sm:$0xff] %vm1375, %v1668
        %1701 = vst.msk [vmem:[#allocation2 + $0x18] sm:$0xff] %vm1375, %v1669
        %1702 = vst.msk [vmem:[#allocation2 + $0x20] sm:$0xff] %vm1375, %v1670
        %1703 = vst.msk [vmem:[#allocation2 + $0x28] sm:$0xff] %vm1375, %v1671
        %1704 = vst.msk [vmem:[#allocation2 + $0x30] sm:$0xff] %vm1375, %v1672
        %1705 = vst.msk [vmem:[#allocation2 + $0x38] sm:$0xff] %vm1375, %v1673
        %1706 = vst.msk [vmem:[#allocation2 + $0x40] sm:$0xff] %vm1375, %v1674
        %1707 = vst.msk [vmem:[#allocation2 + $0x48] sm:$0xff] %vm1375, %v1675
        %1708 = vst.msk [vmem:[#allocation2 + $0x50] sm:$0xff] %vm1375, %v1676
        %1709 = vst.msk [vmem:[#allocation2 + $0x58] sm:$0xff] %vm1375, %v1677
        %1710 = vst.msk [vmem:[#allocation2 + $0x60] sm:$0xff] %vm1375, %v1678
        %1711 = vst.msk [vmem:[#allocation2 + $0x68] sm:$0xff] %vm1375, %v1679
        %1712 = vst.msk [vmem:[#allocation2 + $0x70] sm:$0xff] %vm1375, %v1680
        %1713 = vst.msk [vmem:[#allocation2 + $0x78] sm:$0xff] %vm1375, %v1681
        %1714 = vst.msk [vmem:[#allocation2 + $0x80] sm:$0xff] %vm1375, %v1682
        %1715 = vst.msk [vmem:[#allocation2 + $0x88] sm:$0xff] %vm1375, %v1683
        %1716 = vst.msk [vmem:[#allocation2 + $0x90] sm:$0xff] %vm1375, %v1684
        %1717 = vst.msk [vmem:[#allocation2 + $0x98] sm:$0xff] %vm1375, %v1685
        %1718 = vst.msk [vmem:[#allocation2 + $0xa0] sm:$0xff] %vm1375, %v1686
        %1719 = vst.msk [vmem:[#allocation2 + $0xa8] sm:$0xff] %vm1375, %v1687
        %1720 = vst.msk [vmem:[#allocation2 + $0xb0] sm:$0xff] %vm1375, %v1688
        %1721 = vst.msk [vmem:[#allocation2 + $0xb8] sm:$0xff] %vm1375, %v1689
        %1722 = vst.msk [vmem:[#allocation2 + $0xc0] sm:$0xff] %vm1375, %v1690
        %1723 = vst.msk [vmem:[#allocation2 + $0xc8] sm:$0xff] %vm1375, %v1691
        %1724 = vst.msk [vmem:[#allocation2 + $0xd0] sm:$0xff] %vm1375, %v1692
        %1725 = vst.msk [vmem:[#allocation2 + $0xd8] sm:$0xff] %vm1375, %v1693
        %1726 = vst.msk [vmem:[#allocation2 + $0xe0] sm:$0xff] %vm1375, %v1694
        %1727 = vst.msk [vmem:[#allocation2 + $0xe8] sm:$0xff] %vm1375, %v1695
        %1728 = vst.msk [vmem:[#allocation2 + $0xf0] sm:$0xff] %vm1375, %v1696
        %1729 = vst.msk [vmem:[#allocation2 + $0xf8] sm:$0xff] %vm1375, %v1697
        %v1730 = vld [vmem:[#allocation2] sm:$0xff]
        %v1731 = vld [vmem:[#allocation2 + $0x8] sm:$0xff]
        %v1732 = vld [vmem:[#allocation2 + $0x10] sm:$0xff]
        %v1733 = vld [vmem:[#allocation2 + $0x18] sm:$0xff]
        %v1734 = vld [vmem:[#allocation2 + $0x20] sm:$0xff]
        %v1735 = vld [vmem:[#allocation2 + $0x28] sm:$0xff]
        %v1736 = vld [vmem:[#allocation2 + $0x30] sm:$0xff]
        %v1737 = vld [vmem:[#allocation2 + $0x38] sm:$0xff]
        %v1738 = vld [vmem:[#allocation2 + $0x40] sm:$0xff]
        %v1739 = vld [vmem:[#allocation2 + $0x48] sm:$0xff]
        %v1740 = vld [vmem:[#allocation2 + $0x50] sm:$0xff]
        %v1741 = vld [vmem:[#allocation2 + $0x58] sm:$0xff]
        %v1742 = vld [vmem:[#allocation2 + $0x60] sm:$0xff]
        %v1743 = vld [vmem:[#allocation2 + $0x68] sm:$0xff]
        %v1744 = vld [vmem:[#allocation2 + $0x70] sm:$0xff]
        %v1745 = vld [vmem:[#allocation2 + $0x78] sm:$0xff]
        %v1746 = vld [vmem:[#allocation2 + $0x80] sm:$0xff]
        %v1747 = vld [vmem:[#allocation2 + $0x88] sm:$0xff]
        %v1748 = vld [vmem:[#allocation2 + $0x90] sm:$0xff]
        %v1749 = vld [vmem:[#allocation2 + $0x98] sm:$0xff]
        %v1750 = vld [vmem:[#allocation2 + $0xa0] sm:$0xff]
        %v1751 = vld [vmem:[#allocation2 + $0xa8] sm:$0xff]
        %v1752 = vld [vmem:[#allocation2 + $0xb0] sm:$0xff]
        %v1753 = vld [vmem:[#allocation2 + $0xb8] sm:$0xff]
        %v1754 = vld [vmem:[#allocation2 + $0xc0] sm:$0xff]
        %v1755 = vld [vmem:[#allocation2 + $0xc8] sm:$0xff]
        %v1756 = vld [vmem:[#allocation2 + $0xd0] sm:$0xff]
        %v1757 = vld [vmem:[#allocation2 + $0xd8] sm:$0xff]
        %v1758 = vld [vmem:[#allocation2 + $0xe0] sm:$0xff]
        %v1759 = vld [vmem:[#allocation2 + $0xe8] sm:$0xff]
        %v1760 = vld [vmem:[#allocation2 + $0xf0] sm:$0xff]
        %v1761 = vld [vmem:[#allocation2 + $0xf8] sm:$0xff]
        %v1763 = vshrl.u32 %v327, 16
        %v1765 = vrot.slane %v1763, 4
        %v1766 = vshll.u32 %v327, 16
        %v1768 = vrot.slane %v1766, 5
        %v1769 = vor.u32 %v1765, %v1768
        %v1770 = vrot.slane %v1769, 4
        %v1772 = vshll.u32 %v328, 16
        %v1774 = vrot.slane %v1772, 5
        %v1775 = vsel %vm332, %v1770, %v1774
        %v1776 = vshrl.u32 %v328, 16
        %v1778 = vrot.slane %v1776, 4
        %v1779 = vor.u32 %v1778, %v1774
        %v1780 = vrot.slane %v1779, 4
        %v1782 = vshll.u32 %v329, 16
        %v1784 = vrot.slane %v1782, 5
        %v1785 = vsel %vm332, %v1780, %v1784
        %v1789 = vrot.slane %v327, 5
        %v1790 = vrot.slane %v1789, 4
        %v1791 = vrot.slane %v328, 5
        %v1792 = vsel %vm767, %v1790, %v1791
        %v1793 = vrot.slane %v1791, 4
        %v1794 = vrot.slane %v329, 5
        %v1795 = vsel %vm767, %v1793, %v1794
        %v1796 = vunpack.c.l.b16 %v327
        %v1797 = vunpack.c.l.b16 %v328
        %v1798 = vpack.c.b16 %v1797, %v1796
        %v1799 = vunpack.c.l.b16 %v1775
        %v1800 = vunpack.c.l.b16 %v1785
        %v1801 = vpack.c.b16 %v1800, %v1799
        %1802 = vrot.lane.b32.xlu0 %v1801, 4
        %v1803 = vpop.permute.xlu0 %1802
        %v1804 = vunpack.c.l.b16 %v1792
        %v1805 = vunpack.c.l.b16 %v1795
        %v1806 = vpack.c.b16 %v1805, %v1804
        %1807 = vrot.lane.b32.xlu0 %v1806, 8
        %v1808 = vpop.permute.xlu0 %1807
        %v1811 = vsel %vm1088, %v1798, %v1803
        %v1813 = vsel %vm1137, %v1811, %v1808
        %v1814 = vld [vmem:[#allocation6 + $0xc] sm:$0xf]
        %v1815 = vld [vmem:[#allocation6 + $0x10] sm:$0x3]
        %v1818 = vunpack.c.l.b16 %v1814
        %v1819 = vunpack.c.l.b16 %v1815
        %v1820 = vpack.c.b16 %v1819, %v1818
        %v1821 = vsel %vm1177, %v1813, 0
        %v1824 = vsel %vm1210, %v1820, 0
        %1826 = vmatprep.subr.bf16.mxu0 0
        %1827 = vmatpush1.bf16.msra.mxu0 %v1824
        %1828 = vmatprep.subr.bf16.mxu0 0
        %1829 = vmatpush1.bf16.msra.mxu0 0
        %1830 = vmatprep.subr.bf16.mxu0 0
        %1831 = vmatpush1.bf16.msra.mxu0 0
        %1832 = vmatprep.subr.bf16.mxu0 0
        %1833 = vmatpush1.bf16.msra.mxu0 0
        %1834 = vmatprep.subr.bf16.mxu0 0
        %1835 = vmatpush1.bf16.msra.mxu0 0
        %1836 = vmatprep.subr.bf16.mxu0 0
        %1837 = vmatpush1.bf16.msra.mxu0 0
        %1838 = vmatprep.subr.bf16.mxu0 0
        %1839 = vmatpush1.bf16.msra.mxu0 0
        %1840 = vmatprep.subr.bf16.mxu0 0
        %1841 = vmatpush1.bf16.msra.mxu0 0
        %1842 = vmatprep.subr.bf16.mxu0 0
        %1843 = vmatpush1.bf16.msra.mxu0 0
        %1844 = vmatprep.subr.bf16.mxu0 0
        %1845 = vmatpush1.bf16.msra.mxu0 0
        %1846 = vmatprep.subr.bf16.mxu0 0
        %1847 = vmatpush1.bf16.msra.mxu0 0
        %1848 = vmatprep.subr.bf16.mxu0 0
        %1849 = vmatpush1.bf16.msra.mxu0 0
        %1850 = vmatprep.subr.bf16.mxu0 0
        %1851 = vmatpush1.bf16.msra.mxu0 0
        %1852 = vmatprep.subr.bf16.mxu0 0
        %1853 = vmatpush1.bf16.msra.mxu0 0
        %1854 = vmatprep.subr.bf16.mxu0 0
        %1855 = vmatpush1.bf16.msra.mxu0 0
        %1856 = vmatprep.subr.bf16.mxu0 0
        %1857 = vmatpush1.bf16.msra.mxu0 0
        %1858 = vmatprep.mubr.bf16.mxu0 0
        %1859 = vmatmul.mubr.bf16.gmra.mrb[0].mxu0 %v1182
        %v1860 = vpop.f32.mrb[0].mxu0
        %v1861 = vadd.f32 0.0, %v1860
        %v1862 = vpop.f32.mrb[0].mxu0
        %v1863 = vpop.f32.mrb[0].mxu0
        %v1864 = vadd.f32 0.0, %v1863
        %v1865 = vpop.f32.mrb[0].mxu0
        %1866 = vmatprep.mubr.bf16.mxu0 0
        %1867 = vmatmul.mubr.bf16.gmra.mrb[0].mxu0 %v1184
        %v1868 = vpop.f32.mrb[0].mxu0
        %v1869 = vadd.f32 0.0, %v1868
        %v1870 = vpop.f32.mrb[0].mxu0
        %v1871 = vpop.f32.mrb[0].mxu0
        %v1872 = vadd.f32 0.0, %v1871
        %v1873 = vpop.f32.mrb[0].mxu0
        %1874 = vmatprep.mubr.bf16.mxu0 0
        %1875 = vmatmul.mubr.bf16.gmra.mrb[0].mxu0 %v1186
        %v1876 = vpop.f32.mrb[0].mxu0
        %v1877 = vadd.f32 0.0, %v1876
        %v1878 = vpop.f32.mrb[0].mxu0
        %v1879 = vpop.f32.mrb[0].mxu0
        %v1880 = vadd.f32 0.0, %v1879
        %v1881 = vpop.f32.mrb[0].mxu0
        %1882 = vmatprep.mubr.bf16.mxu0 0
        %1883 = vmatmul.mubr.bf16.gmra.mrb[0].mxu0 %v1188
        %v1884 = vpop.f32.mrb[0].mxu0
        %v1885 = vadd.f32 0.0, %v1884
        %v1886 = vpop.f32.mrb[0].mxu0
        %v1887 = vpop.f32.mrb[0].mxu0
        %v1888 = vadd.f32 0.0, %v1887
        %v1889 = vpop.f32.mrb[0].mxu0
        %1890 = vmatprep.mubr.bf16.mxu0 0
        %1891 = vmatmul.mubr.bf16.gmra.mrb[0].mxu0 %v1190
        %v1892 = vpop.f32.mrb[0].mxu0
        %v1893 = vadd.f32 0.0, %v1892
        %v1894 = vpop.f32.mrb[0].mxu0
        %v1895 = vpop.f32.mrb[0].mxu0
        %v1896 = vadd.f32 0.0, %v1895
        %v1897 = vpop.f32.mrb[0].mxu0
        %1898 = vmatprep.mubr.bf16.mxu0 0
        %1899 = vmatmul.mubr.bf16.gmra.mrb[0].mxu0 %v1192
        %v1900 = vpop.f32.mrb[0].mxu0
        %v1901 = vadd.f32 0.0, %v1900
        %v1902 = vpop.f32.mrb[0].mxu0
        %v1903 = vpop.f32.mrb[0].mxu0
        %v1904 = vadd.f32 0.0, %v1903
        %v1905 = vpop.f32.mrb[0].mxu0
        %1906 = vmatprep.mubr.bf16.mxu0 0
        %1907 = vmatmul.mubr.bf16.gmra.mrb[0].mxu0 %v1194
        %v1908 = vpop.f32.mrb[0].mxu0
        %v1909 = vadd.f32 0.0, %v1908
        %v1910 = vpop.f32.mrb[0].mxu0
        %v1911 = vpop.f32.mrb[0].mxu0
        %v1912 = vadd.f32 0.0, %v1911
        %v1913 = vpop.f32.mrb[0].mxu0
        %1914 = vmatprep.mubr.bf16.mxu0 0
        %1915 = vmatmul.mubr.bf16.gmra.mrb[0].mxu0 %v1196
        %v1916 = vpop.f32.mrb[0].mxu0
        %v1917 = vadd.f32 0.0, %v1916
        %v1918 = vpop.f32.mrb[0].mxu0
        %v1919 = vpop.f32.mrb[0].mxu0
        %v1920 = vadd.f32 0.0, %v1919
        %v1921 = vpop.f32.mrb[0].mxu0
        %1922 = vmatprep.mubr.bf16.mxu0 0
        %1923 = vmatmul.mubr.bf16.gmra.mrb[0].mxu0 %v1198
        %v1924 = vpop.f32.mrb[0].mxu0
        %v1925 = vadd.f32 0.0, %v1924
        %v1926 = vpop.f32.mrb[0].mxu0
        %v1927 = vpop.f32.mrb[0].mxu0
        %v1928 = vadd.f32 0.0, %v1927
        %v1929 = vpop.f32.mrb[0].mxu0
        %1930 = vmatprep.mubr.bf16.mxu0 0
        %1931 = vmatmul.mubr.bf16.gmra.mrb[0].mxu0 %v1200
        %v1932 = vpop.f32.mrb[0].mxu0
        %v1933 = vadd.f32 0.0, %v1932
        %v1934 = vpop.f32.mrb[0].mxu0
        %v1935 = vpop.f32.mrb[0].mxu0
        %v1936 = vadd.f32 0.0, %v1935
        %v1937 = vpop.f32.mrb[0].mxu0
        %1938 = vmatprep.mubr.bf16.mxu0 0
        %1939 = vmatmul.mubr.bf16.gmra.mrb[0].mxu0 %v1202
        %v1940 = vpop.f32.mrb[0].mxu0
        %v1941 = vadd.f32 0.0, %v1940
        %v1942 = vpop.f32.mrb[0].mxu0
        %v1943 = vpop.f32.mrb[0].mxu0
        %v1944 = vadd.f32 0.0, %v1943
        %v1945 = vpop.f32.mrb[0].mxu0
        %1946 = vmatprep.mubr.bf16.mxu0 0
        %1947 = vmatmul.mubr.bf16.gmra.mrb[0].mxu0 %v1204
        %v1948 = vpop.f32.mrb[0].mxu0
        %v1949 = vadd.f32 0.0, %v1948
        %v1950 = vpop.f32.mrb[0].mxu0
        %v1951 = vpop.f32.mrb[0].mxu0
        %v1952 = vadd.f32 0.0, %v1951
        %v1953 = vpop.f32.mrb[0].mxu0
        %1954 = vmatprep.mubr.bf16.mxu0 0
        %1955 = vmatmul.mubr.bf16.gmra.mrb[0].mxu0 %v1206
        %v1956 = vpop.f32.mrb[0].mxu0
        %v1957 = vadd.f32 0.0, %v1956
        %v1958 = vpop.f32.mrb[0].mxu0
        %v1959 = vpop.f32.mrb[0].mxu0
        %v1960 = vadd.f32 0.0, %v1959
        %v1961 = vpop.f32.mrb[0].mxu0
        %1962 = vmatprep.mubr.bf16.mxu0 0
        %1963 = vmatmul.mubr.bf16.gmra.mrb[0].mxu0 %v1208
        %v1964 = vpop.f32.mrb[0].mxu0
        %v1965 = vadd.f32 0.0, %v1964
        %v1966 = vpop.f32.mrb[0].mxu0
        %v1967 = vpop.f32.mrb[0].mxu0
        %v1968 = vadd.f32 0.0, %v1967
        %v1969 = vpop.f32.mrb[0].mxu0
        %1970 = vmatprep.mubr.bf16.mxu0 0
        %1971 = vmatmul.mubr.bf16.gmra.mrb[0].mxu0 %v1500
        %v1972 = vpop.f32.mrb[0].mxu0
        %v1973 = vadd.f32 0.0, %v1972
        %v1974 = vpop.f32.mrb[0].mxu0
        %v1975 = vpop.f32.mrb[0].mxu0
        %v1976 = vadd.f32 0.0, %v1975
        %v1977 = vpop.f32.mrb[0].mxu0
        %1978 = vmatprep.mubr.bf16.mxu0 0
        %1979 = vmatmul.mubr.bf16.gmra.mrb[0].mxu0 %v1821
        %v1980 = vpop.f32.mrb[0].mxu0
        %v1981 = vadd.f32 0.0, %v1980
        %v1982 = vpop.f32.mrb[0].mxu0
        %v1983 = vpop.f32.mrb[0].mxu0
        %v1984 = vadd.f32 0.0, %v1983
        %v1985 = vpop.f32.mrb[0].mxu0
        %1986 = vdwg.mxu0
        %v1987 = vadd.f32 %v1730, %v1861
        %v1988 = vadd.f32 %v1731, %v1864
        %v1989 = vadd.f32 %v1732, %v1869
        %v1990 = vadd.f32 %v1733, %v1872
        %v1991 = vadd.f32 %v1734, %v1877
        %v1992 = vadd.f32 %v1735, %v1880
        %v1993 = vadd.f32 %v1736, %v1885
        %v1994 = vadd.f32 %v1737, %v1888
        %v1995 = vadd.f32 %v1738, %v1893
        %v1996 = vadd.f32 %v1739, %v1896
        %v1997 = vadd.f32 %v1740, %v1901
        %v1998 = vadd.f32 %v1741, %v1904
        %v1999 = vadd.f32 %v1742, %v1909
        %v2000 = vadd.f32 %v1743, %v1912
        %v2001 = vadd.f32 %v1744, %v1917
        %v2002 = vadd.f32 %v1745, %v1920
        %v2003 = vadd.f32 %v1746, %v1925
        %v2004 = vadd.f32 %v1747, %v1928
        %v2005 = vadd.f32 %v1748, %v1933
        %v2006 = vadd.f32 %v1749, %v1936
        %v2007 = vadd.f32 %v1750, %v1941
        %v2008 = vadd.f32 %v1751, %v1944
        %v2009 = vadd.f32 %v1752, %v1949
        %v2010 = vadd.f32 %v1753, %v1952
        %v2011 = vadd.f32 %v1754, %v1957
        %v2012 = vadd.f32 %v1755, %v1960
        %v2013 = vadd.f32 %v1756, %v1965
        %v2014 = vadd.f32 %v1757, %v1968
        %v2015 = vadd.f32 %v1758, %v1973
        %v2016 = vadd.f32 %v1759, %v1976
        %v2017 = vadd.f32 %v1760, %v1981
        %v2018 = vadd.f32 %v1761, %v1984
        %v2019 = vld [vmem:[#allocation8] sm:$0x1]
        %v2021 = vlaneseq
        %v2022 = vshrl.u32 %v2021, 7
        %v2023 = vsub.s32 0, %v2022
        %v2024 = vrot.slane %v2019, %v2023
        %v2026 = vadd.f32 %v1987, %v2024
        %v2027 = vadd.f32 %v1988, %v2024
        %v2028 = vadd.f32 %v1989, %v2024
        %v2029 = vadd.f32 %v1990, %v2024
        %v2030 = vadd.f32 %v1991, %v2024
        %v2031 = vadd.f32 %v1992, %v2024
        %v2032 = vadd.f32 %v1993, %v2024
        %v2033 = vadd.f32 %v1994, %v2024
        %v2034 = vadd.f32 %v1995, %v2024
        %v2035 = vadd.f32 %v1996, %v2024
        %v2036 = vadd.f32 %v1997, %v2024
        %v2037 = vadd.f32 %v1998, %v2024
        %v2038 = vadd.f32 %v1999, %v2024
        %v2039 = vadd.f32 %v2000, %v2024
        %v2040 = vadd.f32 %v2001, %v2024
        %v2041 = vadd.f32 %v2002, %v2024
        %v2042 = vadd.f32 %v2003, %v2024
        %v2043 = vadd.f32 %v2004, %v2024
        %v2044 = vadd.f32 %v2005, %v2024
        %v2045 = vadd.f32 %v2006, %v2024
        %v2046 = vadd.f32 %v2007, %v2024
        %v2047 = vadd.f32 %v2008, %v2024
        %v2048 = vadd.f32 %v2009, %v2024
        %v2049 = vadd.f32 %v2010, %v2024
        %v2050 = vadd.f32 %v2011, %v2024
        %v2051 = vadd.f32 %v2012, %v2024
        %v2052 = vadd.f32 %v2013, %v2024
        %v2053 = vadd.f32 %v2014, %v2024
        %v2054 = vadd.f32 %v2015, %v2024
        %v2055 = vadd.f32 %v2016, %v2024
        %v2056 = vadd.f32 %v2017, %v2024
        %v2057 = vadd.f32 %v2018, %v2024
        %vm2058 = vcmp.ge.f32.partialorder %v2026, 0.0
        %vm2059 = vcmp.ge.f32.partialorder %v2027, 0.0
        %vm2060 = vcmp.ge.f32.partialorder %v2028, 0.0
        %vm2061 = vcmp.ge.f32.partialorder %v2029, 0.0
        %vm2062 = vcmp.ge.f32.partialorder %v2030, 0.0
        %vm2063 = vcmp.ge.f32.partialorder %v2031, 0.0
        %vm2064 = vcmp.ge.f32.partialorder %v2032, 0.0
        %vm2065 = vcmp.ge.f32.partialorder %v2033, 0.0
        %vm2066 = vcmp.ge.f32.partialorder %v2034, 0.0
        %vm2067 = vcmp.ge.f32.partialorder %v2035, 0.0
        %vm2068 = vcmp.ge.f32.partialorder %v2036, 0.0
        %vm2069 = vcmp.ge.f32.partialorder %v2037, 0.0
        %vm2070 = vcmp.ge.f32.partialorder %v2038, 0.0
        %vm2071 = vcmp.ge.f32.partialorder %v2039, 0.0
        %vm2072 = vcmp.ge.f32.partialorder %v2040, 0.0
        %vm2073 = vcmp.ge.f32.partialorder %v2041, 0.0
        %vm2074 = vcmp.ge.f32.partialorder %v2042, 0.0
        %vm2075 = vcmp.ge.f32.partialorder %v2043, 0.0
        %vm2076 = vcmp.ge.f32.partialorder %v2044, 0.0
        %vm2077 = vcmp.ge.f32.partialorder %v2045, 0.0
        %vm2078 = vcmp.ge.f32.partialorder %v2046, 0.0
        %vm2079 = vcmp.ge.f32.partialorder %v2047, 0.0
        %vm2080 = vcmp.ge.f32.partialorder %v2048, 0.0
        %vm2081 = vcmp.ge.f32.partialorder %v2049, 0.0
        %vm2082 = vcmp.ge.f32.partialorder %v2050, 0.0
        %vm2083 = vcmp.ge.f32.partialorder %v2051, 0.0
        %vm2084 = vcmp.ge.f32.partialorder %v2052, 0.0
        %vm2085 = vcmp.ge.f32.partialorder %v2053, 0.0
        %vm2086 = vcmp.ge.f32.partialorder %v2054, 0.0
        %vm2087 = vcmp.ge.f32.partialorder %v2055, 0.0
        %vm2088 = vcmp.ge.f32.partialorder %v2056, 0.0
        %vm2089 = vcmp.ge.f32.partialorder %v2057, 0.0
        %v2090 = vld [vmem:[#allocation9] sm:$0x1]
        %v2092 = vlaneseq
        %v2093 = vshrl.u32 %v2092, 7
        %v2094 = vsub.s32 0, %v2093
        %v2095 = vrot.slane %v2090, %v2094
        %v2097 = vmul.f32 %v2026, %v2095
        %v2098 = vmul.f32 %v2027, %v2095
        %v2099 = vmul.f32 %v2028, %v2095
        %v2100 = vmul.f32 %v2029, %v2095
        %v2101 = vmul.f32 %v2030, %v2095
        %v2102 = vmul.f32 %v2031, %v2095
        %v2103 = vmul.f32 %v2032, %v2095
        %v2104 = vmul.f32 %v2033, %v2095
        %v2105 = vmul.f32 %v2034, %v2095
        %v2106 = vmul.f32 %v2035, %v2095
        %v2107 = vmul.f32 %v2036, %v2095
        %v2108 = vmul.f32 %v2037, %v2095
        %v2109 = vmul.f32 %v2038, %v2095
        %v2110 = vmul.f32 %v2039, %v2095
        %v2111 = vmul.f32 %v2040, %v2095
        %v2112 = vmul.f32 %v2041, %v2095
        %v2113 = vmul.f32 %v2042, %v2095
        %v2114 = vmul.f32 %v2043, %v2095
        %v2115 = vmul.f32 %v2044, %v2095
        %v2116 = vmul.f32 %v2045, %v2095
        %v2117 = vmul.f32 %v2046, %v2095
        %v2118 = vmul.f32 %v2047, %v2095
        %v2119 = vmul.f32 %v2048, %v2095
        %v2120 = vmul.f32 %v2049, %v2095
        %v2121 = vmul.f32 %v2050, %v2095
        %v2122 = vmul.f32 %v2051, %v2095
        %v2123 = vmul.f32 %v2052, %v2095
        %v2124 = vmul.f32 %v2053, %v2095
        %v2125 = vmul.f32 %v2054, %v2095
        %v2126 = vmul.f32 %v2055, %v2095
        %v2127 = vmul.f32 %v2056, %v2095
        %v2128 = vmul.f32 %v2057, %v2095
        %v2129 = vsel %vm2058, %v2026, %v2097
        %v2130 = vsel %vm2059, %v2027, %v2098
        %v2131 = vsel %vm2060, %v2028, %v2099
        %v2132 = vsel %vm2061, %v2029, %v2100
        %v2133 = vsel %vm2062, %v2030, %v2101
        %v2134 = vsel %vm2063, %v2031, %v2102
        %v2135 = vsel %vm2064, %v2032, %v2103
        %v2136 = vsel %vm2065, %v2033, %v2104
        %v2137 = vsel %vm2066, %v2034, %v2105
        %v2138 = vsel %vm2067, %v2035, %v2106
        %v2139 = vsel %vm2068, %v2036, %v2107
        %v2140 = vsel %vm2069, %v2037, %v2108
        %v2141 = vsel %vm2070, %v2038, %v2109
        %v2142 = vsel %vm2071, %v2039, %v2110
        %v2143 = vsel %vm2072, %v2040, %v2111
        %v2144 = vsel %vm2073, %v2041, %v2112
        %v2145 = vsel %vm2074, %v2042, %v2113
        %v2146 = vsel %vm2075, %v2043, %v2114
        %v2147 = vsel %vm2076, %v2044, %v2115
        %v2148 = vsel %vm2077, %v2045, %v2116
        %v2149 = vsel %vm2078, %v2046, %v2117
        %v2150 = vsel %vm2079, %v2047, %v2118
        %v2151 = vsel %vm2080, %v2048, %v2119
        %v2152 = vsel %vm2081, %v2049, %v2120
        %v2153 = vsel %vm2082, %v2050, %v2121
        %v2154 = vsel %vm2083, %v2051, %v2122
        %v2155 = vsel %vm2084, %v2052, %v2123
        %v2156 = vsel %vm2085, %v2053, %v2124
        %v2157 = vsel %vm2086, %v2054, %v2125
        %v2158 = vsel %vm2087, %v2055, %v2126
        %v2159 = vsel %vm2088, %v2056, %v2127
        %v2160 = vsel %vm2089, %v2057, %v2128
        %v2161 = vpack.c.bf16 %v2130, %v2129
        %v2162 = vpack.c.bf16 %v2132, %v2131
        %v2163 = vpack.c.bf16 %v2134, %v2133
        %v2164 = vpack.c.bf16 %v2136, %v2135
        %v2165 = vpack.c.bf16 %v2138, %v2137
        %v2166 = vpack.c.bf16 %v2140, %v2139
        %v2167 = vpack.c.bf16 %v2142, %v2141
        %v2168 = vpack.c.bf16 %v2144, %v2143
        %v2169 = vpack.c.bf16 %v2146, %v2145
        %v2170 = vpack.c.bf16 %v2148, %v2147
        %v2171 = vpack.c.bf16 %v2150, %v2149
        %v2172 = vpack.c.bf16 %v2152, %v2151
        %v2173 = vpack.c.bf16 %v2154, %v2153
        %v2174 = vpack.c.bf16 %v2156, %v2155
        %v2175 = vpack.c.bf16 %v2158, %v2157
        %v2176 = vpack.c.bf16 %v2160, %v2159
        %v2193 = vunpack.c.l.b16 %v2161
        %v2194 = vunpack.c.h.b16 %v2161
        %v2195 = vunpack.c.l.b16 %v2162
        %v2196 = vunpack.c.h.b16 %v2162
        %v2197 = vunpack.c.l.b16 %v2163
        %v2198 = vunpack.c.h.b16 %v2163
        %v2199 = vunpack.c.l.b16 %v2164
        %v2200 = vunpack.c.h.b16 %v2164
        %v2201 = vunpack.c.l.b16 %v2165
        %v2202 = vunpack.c.h.b16 %v2165
        %v2203 = vunpack.c.l.b16 %v2166
        %v2204 = vunpack.c.h.b16 %v2166
        %v2205 = vunpack.c.l.b16 %v2167
        %v2206 = vunpack.c.h.b16 %v2167
        %v2207 = vunpack.c.l.b16 %v2168
        %v2208 = vunpack.c.h.b16 %v2168
        %v2209 = vunpack.c.l.b16 %v2169
        %v2210 = vunpack.c.h.b16 %v2169
        %v2211 = vunpack.c.l.b16 %v2170
        %v2212 = vunpack.c.h.b16 %v2170
        %v2213 = vunpack.c.l.b16 %v2171
        %v2214 = vunpack.c.h.b16 %v2171
        %v2215 = vunpack.c.l.b16 %v2172
        %v2216 = vunpack.c.h.b16 %v2172
        %v2217 = vunpack.c.l.b16 %v2173
        %v2218 = vunpack.c.h.b16 %v2173
        %v2219 = vunpack.c.l.b16 %v2174
        %v2220 = vunpack.c.h.b16 %v2174
        %v2221 = vunpack.c.l.b16 %v2175
        %v2222 = vunpack.c.h.b16 %v2175
        %v2223 = vunpack.c.l.b16 %v2176
        %v2224 = vunpack.c.h.b16 %v2176
        %v2225 = vpack.c.b16 %v2193, %v2193
        %v2226 = vpack.c.b16 %v2194, %v2194
        %v2227 = vpack.c.b16 %v2195, %v2195
        %v2228 = vpack.c.b16 %v2196, %v2196
        %v2229 = vpack.c.b16 %v2197, %v2197
        %v2230 = vpack.c.b16 %v2198, %v2198
        %v2231 = vpack.c.b16 %v2199, %v2199
        %v2232 = vpack.c.b16 %v2200, %v2200
        %v2233 = vpack.c.b16 %v2201, %v2201
        %v2234 = vpack.c.b16 %v2202, %v2202
        %v2235 = vpack.c.b16 %v2203, %v2203
        %v2236 = vpack.c.b16 %v2204, %v2204
        %v2237 = vpack.c.b16 %v2205, %v2205
        %v2238 = vpack.c.b16 %v2206, %v2206
        %v2239 = vpack.c.b16 %v2207, %v2207
        %v2240 = vpack.c.b16 %v2208, %v2208
        %v2241 = vpack.c.b16 %v2209, %v2209
        %v2242 = vpack.c.b16 %v2210, %v2210
        %v2243 = vpack.c.b16 %v2211, %v2211
        %v2244 = vpack.c.b16 %v2212, %v2212
        %v2245 = vpack.c.b16 %v2213, %v2213
        %v2246 = vpack.c.b16 %v2214, %v2214
        %v2247 = vpack.c.b16 %v2215, %v2215
        %v2248 = vpack.c.b16 %v2216, %v2216
        %v2249 = vpack.c.b16 %v2217, %v2217
        %v2250 = vpack.c.b16 %v2218, %v2218
        %v2251 = vpack.c.b16 %v2219, %v2219
        %v2252 = vpack.c.b16 %v2220, %v2220
        %v2253 = vpack.c.b16 %v2221, %v2221
        %v2254 = vpack.c.b16 %v2222, %v2222
        %v2255 = vpack.c.b16 %v2223, %v2223
        %v2256 = vpack.c.b16 %v2224, %v2224
        %vm2289 = vcmask 60416
        %2290 = vst.msk [vmem:[%s273] sm:$0xf] %vm2289, %v2225
        %2291 = vst.msk [vmem:[%s273 + $0x4] sm:$0xf] %vm2289, %v2226
        %2292 = vst.msk [vmem:[%s273 + $0x10] sm:$0xf] %vm2289, %v2227
        %2293 = vst.msk [vmem:[%s273 + $0x14] sm:$0xf] %vm2289, %v2228
        %2294 = vst.msk [vmem:[%s273 + $0x20] sm:$0xf] %vm2289, %v2229
        %2295 = vst.msk [vmem:[%s273 + $0x24] sm:$0xf] %vm2289, %v2230
        %2296 = vst.msk [vmem:[%s273 + $0x30] sm:$0xf] %vm2289, %v2231
        %2297 = vst.msk [vmem:[%s273 + $0x34] sm:$0xf] %vm2289, %v2232
        %2298 = vst.msk [vmem:[%s273 + $0x40] sm:$0xf] %vm2289, %v2233
        %2299 = vst.msk [vmem:[%s273 + $0x44] sm:$0xf] %vm2289, %v2234
        %2300 = vst.msk [vmem:[%s273 + $0x50] sm:$0xf] %vm2289, %v2235
        %2301 = vst.msk [vmem:[%s273 + $0x54] sm:$0xf] %vm2289, %v2236
        %2302 = vst.msk [vmem:[%s273 + $0x60] sm:$0xf] %vm2289, %v2237
        %2303 = vst.msk [vmem:[%s273 + $0x64] sm:$0xf] %vm2289, %v2238
        %2304 = vst.msk [vmem:[%s273 + $0x70] sm:$0xf] %vm2289, %v2239
        %2305 = vst.msk [vmem:[%s273 + $0x74] sm:$0xf] %vm2289, %v2240
        %2306 = vst.msk [vmem:[%s273 + $0x80] sm:$0xf] %vm2289, %v2241
        %2307 = vst.msk [vmem:[%s273 + $0x84] sm:$0xf] %vm2289, %v2242
        %2308 = vst.msk [vmem:[%s273 + $0x90] sm:$0xf] %vm2289, %v2243
        %2309 = vst.msk [vmem:[%s273 + $0x94] sm:$0xf] %vm2289, %v2244
        %2310 = vst.msk [vmem:[%s273 + $0xa0] sm:$0xf] %vm2289, %v2245
        %2311 = vst.msk [vmem:[%s273 + $0xa4] sm:$0xf] %vm2289, %v2246
        %2312 = vst.msk [vmem:[%s273 + $0xb0] sm:$0xf] %vm2289, %v2247
        %2313 = vst.msk [vmem:[%s273 + $0xb4] sm:$0xf] %vm2289, %v2248
        %2314 = vst.msk [vmem:[%s273 + $0xc0] sm:$0xf] %vm2289, %v2249
        %2315 = vst.msk [vmem:[%s273 + $0xc4] sm:$0xf] %vm2289, %v2250
        %2316 = vst.msk [vmem:[%s273 + $0xd0] sm:$0xf] %vm2289, %v2251
        %2317 = vst.msk [vmem:[%s273 + $0xd4] sm:$0xf] %vm2289, %v2252
        %2318 = vst.msk [vmem:[%s273 + $0xe0] sm:$0xf] %vm2289, %v2253
        %2319 = vst.msk [vmem:[%s273 + $0xe4] sm:$0xf] %vm2289, %v2254
        %2320 = vst.msk [vmem:[%s273 + $0xf0] sm:$0xf] %vm2289, %v2255
        %2321 = vst.msk [vmem:[%s273 + $0xf4] sm:$0xf] %vm2289, %v2256
        %2322 = vrot.lane.b32.xlu0 %v2225, 120
        %v2323 = vpop.permute.xlu0 %2322
        %2324 = vrot.lane.b32.xlu0 %v2226, 120
        %v2325 = vpop.permute.xlu0 %2324
        %2326 = vrot.lane.b32.xlu0 %v2227, 120
        %v2327 = vpop.permute.xlu0 %2326
        %2328 = vrot.lane.b32.xlu0 %v2228, 120
        %v2329 = vpop.permute.xlu0 %2328
        %2330 = vrot.lane.b32.xlu0 %v2229, 120
        %v2331 = vpop.permute.xlu0 %2330
        %2332 = vrot.lane.b32.xlu0 %v2230, 120
        %v2333 = vpop.permute.xlu0 %2332
        %2334 = vrot.lane.b32.xlu0 %v2231, 120
        %v2335 = vpop.permute.xlu0 %2334
        %2336 = vrot.lane.b32.xlu0 %v2232, 120
        %v2337 = vpop.permute.xlu0 %2336
        %2338 = vrot.lane.b32.xlu0 %v2233, 120
        %v2339 = vpop.permute.xlu0 %2338
        %2340 = vrot.lane.b32.xlu0 %v2234, 120
        %v2341 = vpop.permute.xlu0 %2340
        %2342 = vrot.lane.b32.xlu0 %v2235, 120
        %v2343 = vpop.permute.xlu0 %2342
        %2344 = vrot.lane.b32.xlu0 %v2236, 120
        %v2345 = vpop.permute.xlu0 %2344
        %2346 = vrot.lane.b32.xlu0 %v2237, 120
        %v2347 = vpop.permute.xlu0 %2346
        %2348 = vrot.lane.b32.xlu0 %v2238, 120
        %v2349 = vpop.permute.xlu0 %2348
        %2350 = vrot.lane.b32.xlu0 %v2239, 120
        %v2351 = vpop.permute.xlu0 %2350
        %2352 = vrot.lane.b32.xlu0 %v2240, 120
        %v2353 = vpop.permute.xlu0 %2352
        %2354 = vrot.lane.b32.xlu0 %v2241, 120
        %v2355 = vpop.permute.xlu0 %2354
        %2356 = vrot.lane.b32.xlu0 %v2242, 120
        %v2357 = vpop.permute.xlu0 %2356
        %2358 = vrot.lane.b32.xlu0 %v2243, 120
        %v2359 = vpop.permute.xlu0 %2358
        %2360 = vrot.lane.b32.xlu0 %v2244, 120
        %v2361 = vpop.permute.xlu0 %2360
        %2362 = vrot.lane.b32.xlu0 %v2245, 120
        %v2363 = vpop.permute.xlu0 %2362
        %2364 = vrot.lane.b32.xlu0 %v2246, 120
        %v2365 = vpop.permute.xlu0 %2364
        %2366 = vrot.lane.b32.xlu0 %v2247, 120
        %v2367 = vpop.permute.xlu0 %2366
        %2368 = vrot.lane.b32.xlu0 %v2248, 120
        %v2369 = vpop.permute.xlu0 %2368
        %2370 = vrot.lane.b32.xlu0 %v2249, 120
        %v2371 = vpop.permute.xlu0 %2370
        %2372 = vrot.lane.b32.xlu0 %v2250, 120
        %v2373 = vpop.permute.xlu0 %2372
        %2374 = vrot.lane.b32.xlu0 %v2251, 120
        %v2375 = vpop.permute.xlu0 %2374
        %2376 = vrot.lane.b32.xlu0 %v2252, 120
        %v2377 = vpop.permute.xlu0 %2376
        %2378 = vrot.lane.b32.xlu0 %v2253, 120
        %v2379 = vpop.permute.xlu0 %2378
        %2380 = vrot.lane.b32.xlu0 %v2254, 120
        %v2381 = vpop.permute.xlu0 %2380
        %2382 = vrot.lane.b32.xlu0 %v2255, 120
        %v2383 = vpop.permute.xlu0 %2382
        %2384 = vrot.lane.b32.xlu0 %v2256, 120
        %v2385 = vpop.permute.xlu0 %2384
        %s2418 = scalar_lea.vmem %s273, 8 [#allocation11]
        %2419 = vst.msk [vmem:[%s2418] sm:$0xf] %vm2289, %v2323
        %2420 = vst.msk [vmem:[%s2418 + $0x4] sm:$0xf] %vm2289, %v2325
        %2421 = vst.msk [vmem:[%s2418 + $0x10] sm:$0xf] %vm2289, %v2327
        %2422 = vst.msk [vmem:[%s2418 + $0x14] sm:$0xf] %vm2289, %v2329
        %2423 = vst.msk [vmem:[%s2418 + $0x20] sm:$0xf] %vm2289, %v2331
        %2424 = vst.msk [vmem:[%s2418 + $0x24] sm:$0xf] %vm2289, %v2333
        %2425 = vst.msk [vmem:[%s2418 + $0x30] sm:$0xf] %vm2289, %v2335
        %2426 = vst.msk [vmem:[%s2418 + $0x34] sm:$0xf] %vm2289, %v2337
        %2427 = vst.msk [vmem:[%s2418 + $0x40] sm:$0xf] %vm2289, %v2339
        %2428 = vst.msk [vmem:[%s2418 + $0x44] sm:$0xf] %vm2289, %v2341
        %2429 = vst.msk [vmem:[%s2418 + $0x50] sm:$0xf] %vm2289, %v2343
        %2430 = vst.msk [vmem:[%s2418 + $0x54] sm:$0xf] %vm2289, %v2345
        %2431 = vst.msk [vmem:[%s2418 + $0x60] sm:$0xf] %vm2289, %v2347
        %2432 = vst.msk [vmem:[%s2418 + $0x64] sm:$0xf] %vm2289, %v2349
        %2433 = vst.msk [vmem:[%s2418 + $0x70] sm:$0xf] %vm2289, %v2351
        %2434 = vst.msk [vmem:[%s2418 + $0x74] sm:$0xf] %vm2289, %v2353
        %2435 = vst.msk [vmem:[%s2418 + $0x80] sm:$0xf] %vm2289, %v2355
        %2436 = vst.msk [vmem:[%s2418 + $0x84] sm:$0xf] %vm2289, %v2357
        %2437 = vst.msk [vmem:[%s2418 + $0x90] sm:$0xf] %vm2289, %v2359
        %2438 = vst.msk [vmem:[%s2418 + $0x94] sm:$0xf] %vm2289, %v2361
        %2439 = vst.msk [vmem:[%s2418 + $0xa0] sm:$0xf] %vm2289, %v2363
        %2440 = vst.msk [vmem:[%s2418 + $0xa4] sm:$0xf] %vm2289, %v2365
        %2441 = vst.msk [vmem:[%s2418 + $0xb0] sm:$0xf] %vm2289, %v2367
        %2442 = vst.msk [vmem:[%s2418 + $0xb4] sm:$0xf] %vm2289, %v2369
        %2443 = vst.msk [vmem:[%s2418 + $0xc0] sm:$0xf] %vm2289, %v2371
        %2444 = vst.msk [vmem:[%s2418 + $0xc4] sm:$0xf] %vm2289, %v2373
        %2445 = vst.msk [vmem:[%s2418 + $0xd0] sm:$0xf] %vm2289, %v2375
        %2446 = vst.msk [vmem:[%s2418 + $0xd4] sm:$0xf] %vm2289, %v2377
        %2447 = vst.msk [vmem:[%s2418 + $0xe0] sm:$0xf] %vm2289, %v2379
        %2448 = vst.msk [vmem:[%s2418 + $0xe4] sm:$0xf] %vm2289, %v2381
        %2449 = vst.msk [vmem:[%s2418 + $0xf0] sm:$0xf] %vm2289, %v2383
        %2450 = vst.msk [vmem:[%s2418 + $0xf4] sm:$0xf] %vm2289, %v2385
        %s2451 = sand.u32 %s136, 1
        %s2452 = scalar_lea.sflag [#allocation5], %s2451
        %s2453 = sand.u32 %s136, 1
        %s2454 = smul.addr %s2453, 256
        %s2455 = scalar_lea.vmem [#allocation11], %s2454
        // Predicated region
        $region53: #{upsample_block.1} parent=35 // pred_check
          %p2456 = pneg %p146
        $region54: #{upsample_block.1} parent=35 // pred_check_branch
          %2458 = sbr.rel (%p2456) target = $region56
        $region55: #{upsample_block.1} parent=35 // pred_region
          %s2459 = smul.u32 16, %s28
          %s2461 = ssub.s32 4096, 4096
          %2462 = vsyncadd %s2452, %s2461
          %s2463 = smul.addr %s2459, 4
          %s2464 = smul.addr %s27, 64
          %s2465 = sadd.s32 %s2463, %s2464
          %s2466 = smul.addr %s2465, 64
          %s2467 = scalar_lea.hbm %s4, %s2466
          %s2468 = sshll.u32 %s2455, 4
          %s2469 = int_to_ptr.vmem [resolvable:$true] %s2468
          %2474 = dma.vmem_to_hbm [thread:$0]  %s2469, 4096, %s2467, %s2452, 64, 64, 4
        $region56: #{upsample_block.1} parent=35 // pred_fallthru
          _
      $region36: #{upsample_block.1} parent=5 // pred_fallthru
        _
      %p2475 = scmp.le.s32.totalorder 2, %s18
      // Predicated region
      $region57: #{upsample_block.1} parent=5 // pred_check
        %p2476 = pneg %p2475
      $region58: #{upsample_block.1} parent=5 // pred_check_branch
        %2478 = sbr.rel (%p2476) target = $region60
      $region59: #{upsample_block.1} parent=5 // pred_region
        %s2479 = ssub.s32 %s18, 2
        // Predicated region
        $region61: #{upsample_block.1} parent=59 // pred_check
          %p2480 = pneg %p152
        $region62: #{upsample_block.1} parent=59 // pred_check_branch
          %2482 = sbr.rel (%p2480) target = $region64
        $region63: #{upsample_block.1} parent=59 // pred_region
          %s2483 = sand.u32 %s137, 1
          %s2484 = scalar_lea.sflag [#allocation5], %s2483
          %s2485 = sand.u32 %s137, 1
          %s2486 = smul.addr %s2485, 256
          %s2487 = scalar_lea.vmem [#allocation11], %s2486
          %2488 = dma.done %s2484, 4096
        $region64: #{upsample_block.1} parent=59 // pred_fallthru
          _
      $region60: #{upsample_block.1} parent=5 // pred_fallthru
        _
    $region6: #{upsample_block.1} parent=1 // loop_footer
      %s22 = sadd.s32 1, %s18
    $region7: #{upsample_block.1} parent=1 // loop_footer_branch
      %17 = sbr.rel target = $region3
    $region8: #{upsample_block.1} parent=1 // loop_exit
      _
    %2489 = vsyncpa [#allocation4], 1
    %s2490 = scalar_lea.sflag [#allocation4], 1
    %2491 = vsyncpa %s2490, 1
    %2492 = vsyncpa [#allocation7], 1
    %2493 = vsyncpa [#allocation10], 1
    %2494 = vsyncpa [#allocation5], 1
    %s2495 = scalar_lea.sflag [#allocation5], 1
    %2496 = vsyncpa %s2495, 1

</llo_original>
